<compile_context>
chip_gen: v7x
topology: tpu7x:2x2x1
jax: 0.10.0
libtpu: 0.0.40
codegen_flags: <defaults>
</compile_context>

<pallas_src>
import jax
import jax.numpy as jnp
from jax.experimental import pallas as pl
from jax.experimental.pallas import tpu as pltpu

NUM_FEATURES = 4
HIDDEN = 10
NUM_CLASSES = 4

_LANE = 128                    # TPU lane width; weights are zero-padded to this
_W1T_ROW0 = 0                  # slab rows 0:4   -> W1^T  (F, 128)
_B1_ROW = NUM_FEATURES         # slab row  4     -> b1    (128,)
_B2_ROW = NUM_FEATURES + 1     # slab row  5     -> b2    (128,)
_W2T_ROW0 = 8                  # slab rows 8:136 -> W2^T  (128, 128), rows >= HIDDEN zero
_PARAM_ROWS = _W2T_ROW0 + _LANE

_TN_MAX = 4096                 # batch rows per grid step (~2 MiB per VMEM buffer)


def _round_up(a: int, b: int) -> int:
    return (a + b - 1) // b * b


def ffnn_kernel(x_ref, p_ref, o_ref):
    # x_ref: (TN, F) natural layout (batch on sublanes, features on lanes).
    # p_ref: (136, 128) resident parameter slab -> one DMA, stays in VMEM.
    w1t = p_ref[_W1T_ROW0:_W1T_ROW0 + NUM_FEATURES, :]      # (F, 128)
    b1 = p_ref[_B1_ROW:_B1_ROW + 1, :]                      # (1, 128), cols >= H are 0
    b2 = p_ref[_B2_ROW:_B2_ROW + 1, :]                      # (1, 128), cols >= C are 0
    w2t = p_ref[_W2T_ROW0:_W2T_ROW0 + _LANE, :]             # (128, 128)

    x = x_ref[...]                                          # (TN, F) f32

    # Layer 1: h = relu(x @ W1^T + b1) on the MXU (K = F = 4; padded cols stay 0).
    h = jnp.dot(x, w1t, preferred_element_type=jnp.float32,
                precision=jax.lax.Precision.HIGHEST)        # (TN, 128)
    h = jnp.maximum(h + b1, 0.0)

    # Layer 2: y = relu(h @ W2^T + b2) -- fully (8,128)-aligned MXU matmul.
    y = jnp.dot(h, w2t, preferred_element_type=jnp.float32,
                precision=jax.lax.Precision.HIGHEST)        # (TN, 128)
    y = jnp.maximum(y + b2, 0.0)

    o_ref[...] = y[:, :NUM_CLASSES].astype(o_ref.dtype)     # (TN, C)


def pack_params(w1, b1, w2, b2):
    """Pack PyTorch-layout params (W1 (H,F), b1 (H,), W2 (C,H), b2 (C,)) into a
    single resident (136, 128) f32 slab, zero-padded to MXU-friendly widths.
    Done once, outside the forward path."""
    p = jnp.zeros((_PARAM_ROWS, _LANE), jnp.float32)
    p = p.at[_W1T_ROW0:_W1T_ROW0 + NUM_FEATURES, :HIDDEN].set(w1.astype(jnp.float32).T)
    p = p.at[_B1_ROW, :HIDDEN].set(b1.astype(jnp.float32))
    p = p.at[_B2_ROW, :NUM_CLASSES].set(b2.astype(jnp.float32))
    p = p.at[_W2T_ROW0:_W2T_ROW0 + HIDDEN, :NUM_CLASSES].set(w2.astype(jnp.float32).T)
    return p


@jax.jit
def ffnn_forward(x, params):
    """x: (N, F) natural layout; params: (136, 128) slab from pack_params.
    Returns (N, C) f32."""
    n = x.shape[0]
    if n <= _TN_MAX:
        tn, nblocks = n, 1                       # one full block (block dim == array dim)
    else:
        nblocks = (n + _TN_MAX - 1) // _TN_MAX   # balanced tiles: >=2 blocks for megacore,
        tn = _round_up(-(-n // nblocks), 8)      # 8-aligned sublanes, tail waste <= 7 rows
        nblocks = (n + tn - 1) // tn             # ragged tail handled by Pallas block clipping

    return pl.pallas_call(
        ffnn_kernel,
        out_shape=jax.ShapeDtypeStruct((n, NUM_CLASSES), jnp.float32),
        grid_spec=pl.GridSpec(
            grid=(nblocks,),
            in_specs=[
                pl.BlockSpec((tn, NUM_FEATURES), lambda i: (i, 0)),     # batch tile of x
                pl.BlockSpec((_PARAM_ROWS, _LANE), lambda i: (0, 0)),   # resident param slab
            ],
            out_specs=pl.BlockSpec((tn, NUM_CLASSES), lambda i: (i, 0)),
        ),
        compiler_params=pltpu.CompilerParams(
            dimension_semantics=("parallel",),   # batch blocks shard across v7x TensorCores
        ),
    )(x.astype(jnp.float32), params)


def init_params(key):
    # Deterministic init in PyTorch layout, matching nn.Linear's uniform fan-in bounds.
    k1, k2, k3, k4 = jax.random.split(key, 4)
    bound1 = 1.0 / jnp.sqrt(NUM_FEATURES)
    bound2 = 1.0 / jnp.sqrt(HIDDEN)
    w1 = jax.random.uniform(k1, (HIDDEN, NUM_FEATURES), jnp.float32, -bound1, bound1)
    b1 = jax.random.uniform(k2, (HIDDEN,), jnp.float32, -bound1, bound1)
    w2 = jax.random.uniform(k3, (NUM_CLASSES, HIDDEN), jnp.float32, -bound2, bound2)
    b2 = jax.random.uniform(k4, (NUM_CLASSES,), jnp.float32, -bound2, bound2)
    return w1, b1, w2, b2


def reference_forward(x, w1, b1, w2, b2):
    h = jnp.maximum(
        jnp.dot(x, w1.T, precision=jax.lax.Precision.HIGHEST) + b1, 0.0)
    return jnp.maximum(
        jnp.dot(h, w2.T, precision=jax.lax.Precision.HIGHEST) + b2, 0.0)


if __name__ == "__main__":
    key = jax.random.PRNGKey(0)
    kx, kp = jax.random.split(key)

    num_samples = 100  # matches the module's x = torch.randn(100, 4)
    x = jax.random.normal(kx, (num_samples, NUM_FEATURES), jnp.float32)
    w1, b1, w2, b2 = init_params(kp)
    params = pack_params(w1, b1, w2, b2)         # packed once, off the forward path

    out = jax.block_until_ready(ffnn_forward(x, params))
    ref = reference_forward(x, w1, b1, w2, b2)
    assert out.shape == (num_samples, NUM_CLASSES)
    assert jnp.allclose(out, ref, atol=1e-5, rtol=1e-5)

    # Multi-block path: grid > 1 (v7x "parallel" batch axis) with a ragged tail block.
    n_big = 10_000
    xb = jax.random.normal(jax.random.PRNGKey(1), (n_big, NUM_FEATURES), jnp.float32)
    out_b = jax.block_until_ready(ffnn_forward(xb, params))
    ref_b = reference_forward(xb, w1, b1, w2, b2)
    assert out_b.shape == (n_big, NUM_CLASSES)
    assert jnp.allclose(out_b, ref_b, atol=1e-5, rtol=1e-5)

    print("KERNEL_OK")
</pallas_src>

<mosaic_0001>
module attributes {stable_mosaic.version = 11 : i64} {
  func.func @ffnn_kernel(%arg0: i32, %arg1: memref<100x4xf32, #tpu.memory_space<vmem>>, %arg2: memref<136x128xf32, #tpu.memory_space<vmem>>, %arg3: memref<100x4xf32, #tpu.memory_space<vmem>>) attributes {dimension_semantics = [#tpu.dimension_semantics<parallel>], iteration_bounds = array<i64: 1>, scalar_prefetch = 0 : i64, scratch_operands = 0 : i64, tpu.core_type = #tpu.core_type<tc>, window_params = [{transform_indices = @transform_0, window_bounds = array<i64: 100, 4>}, {pipeline_mode = #tpu.pipeline_mode<synchronous>, transform_indices = @transform_1, window_bounds = array<i64: 136, 128>}, {transform_indices = @transform_2, window_bounds = array<i64: 100, 4>}]} {
    %c0 = arith.constant 0 : index
    %c0_0 = arith.constant 0 : index
    %0 = vector.load %arg2[%c0, %c0_0] : memref<136x128xf32, #tpu.memory_space<vmem>>, vector<4x128xf32>
    %c4 = arith.constant 4 : index
    %c0_1 = arith.constant 0 : index
    %1 = vector.load %arg2[%c4, %c0_1] : memref<136x128xf32, #tpu.memory_space<vmem>>, vector<1x128xf32>
    %c5 = arith.constant 5 : index
    %c0_2 = arith.constant 0 : index
    %2 = vector.load %arg2[%c5, %c0_2] : memref<136x128xf32, #tpu.memory_space<vmem>>, vector<1x128xf32>
    %c8 = arith.constant 8 : index
    %c0_3 = arith.constant 0 : index
    %3 = vector.load %arg2[%c8, %c0_3] : memref<136x128xf32, #tpu.memory_space<vmem>>, vector<128x128xf32>
    %c0_4 = arith.constant 0 : index
    %c0_5 = arith.constant 0 : index
    %4 = vector.load %arg1[%c0_4, %c0_5] : memref<100x4xf32, #tpu.memory_space<vmem>>, vector<100x4xf32>
    %cst = arith.constant dense<0.000000e+00> : vector<100x128xf32>
    %5 = tpu.matmul %4, %0, %cst {dimension_numbers = #tpu.dot_dimension_numbers<[1], [0], [0], [1], [0, 0, 1, 1], [], []>, precision = #tpu.contract_precision<fp32>} : vector<100x4xf32>, vector<4x128xf32>, vector<100x128xf32> -> vector<100x128xf32>
    %6 = vector.broadcast %1 : vector<1x128xf32> to vector<100x128xf32>
    %7 = arith.addf %5, %6 : vector<100x128xf32>
    %cst_6 = arith.constant 0.000000e+00 : f32
    %8 = vector.broadcast %cst_6 : f32 to vector<100x128xf32>
    %9 = arith.maximumf %7, %8 : vector<100x128xf32>
    %cst_7 = arith.constant dense<0.000000e+00> : vector<100x128xf32>
    %10 = tpu.matmul %9, %3, %cst_7 {dimension_numbers = #tpu.dot_dimension_numbers<[1], [0], [0], [1], [0, 0, 1, 1], [], []>, precision = #tpu.contract_precision<fp32>} : vector<100x128xf32>, vector<128x128xf32>, vector<100x128xf32> -> vector<100x128xf32>
    %11 = vector.broadcast %2 : vector<1x128xf32> to vector<100x128xf32>
    %12 = arith.addf %10, %11 : vector<100x128xf32>
    %cst_8 = arith.constant 0.000000e+00 : f32
    %13 = vector.broadcast %cst_8 : f32 to vector<100x128xf32>
    %14 = arith.maximumf %12, %13 : vector<100x128xf32>
    %15 = vector.extract_strided_slice %14 {offsets = [0, 0], sizes = [100, 4], strides = [1, 1]} : vector<100x128xf32> to vector<100x4xf32>
    %c0_9 = arith.constant 0 : index
    %c0_10 = arith.constant 0 : index
    %16 = vector.load %arg3[%c0_9, %c0_10] : memref<100x4xf32, #tpu.memory_space<vmem>>, vector<100x4xf32>
    tpu.vector_store %arg3[%c0_9, %c0_10], %15 {strides = array<i32>} : memref<100x4xf32, #tpu.memory_space<vmem>>, vector<100x4xf32>,
    return
  }
  func.func @transform_0(%arg0: i32) -> (i32, i32) {
    %c0_i32 = arith.constant 0 : i32
    %c0_i32_0 = arith.constant 0 : i32
    return %arg0, %c0_i32 : i32, i32
  }
  func.func @transform_1(%arg0: i32) -> (i32, i32) {
    %c0_i32 = arith.constant 0 : i32
    %c0_i32_0 = arith.constant 0 : i32
    %c0_i32_1 = arith.constant 0 : i32
    return %c0_i32, %c0_i32_0 : i32, i32
  }
  func.func @transform_2(%arg0: i32) -> (i32, i32) {
    %c0_i32 = arith.constant 0 : i32
    %c0_i32_0 = arith.constant 0 : i32
    return %arg0, %c0_i32 : i32, i32
  }
}

</mosaic_0001>

<llo_original>
// kernel: ffnn_forward.1
$region0: #{ffnn_forward.1}
  #allocation0 [shape = 'u32[]', space=smem, size = 0x4, offset = 0x4, fixed_abs, tag = 'smem constant byte address 0x4 - core index']
  #allocation1 [shape = 'u32[144,128]{1,0:T(1,128)}', space=vmem, size = 0x12000, scoped, tag = 'internal scratch']
  %s0 = inlined_call_operand.vmem [shape: f32[100,4], index: 0, kind: input, shape index: {}]
  %s1 = inlined_call_operand.hbm [shape: f32[136,128], index: 1, kind: input, shape index: {}]
  %s2 = inlined_call_operand.vmem [shape: f32[100,4], index: 2, kind: output, shape index: {}]
  %s3 = sld [smem:[#allocation0]]
  $region22: #{ffnn_forward.1} parent=0
    _
  %s5 = ssub.s32 1, %s3
  %s6 = scalar_select 0, %s5, %s3
  $region1: #{ffnn_forward.1} parent=0
    #allocation2 [shape = 'u8[69632]{0}', space=vmem, size = 0x11000, scoped, tag = 'input window, operand 1, single buffered']
    #allocation3 [shape = 's32[1]{0}', space=sflag, size = 0x4, scoped, tag = 'scoped memory for ffnn_forward.1']
    %7 = vsyncpa [#allocation3], 0
    // Predicated region
    $region2: #{ffnn_forward.1} parent=1 // pred_check
      _
    $region3: #{ffnn_forward.1} parent=1 // pred_check_branch
      %9 = sbr.rel (0) target = $region5
    $region4: #{ffnn_forward.1} parent=1 // pred_region
      _
    $region5: #{ffnn_forward.1} parent=1 // pred_fallthru
      _
    // Predicated region
    $region6: #{ffnn_forward.1} parent=1 // pred_check
      _
    $region7: #{ffnn_forward.1} parent=1 // pred_check_branch
      %11 = sbr.rel (0) target = $region9
    $region8: #{ffnn_forward.1} parent=1 // pred_region
      %s13 = ssub.s32 2176, 2176
      %14 = vsyncadd [#allocation3], %s13
      %s15 = sshll.u32 [#allocation2], 4
      %s16 = int_to_ptr.vmem [resolvable:$true] %s15
      %21 = dma.hbm_to_vmem [thread:$0]  %s1, 2176, %s16, [#allocation3], 128, 128, 8
    $region9: #{ffnn_forward.1} parent=1 // pred_fallthru
      _
    // Predicated region
    $region10: #{ffnn_forward.1} parent=1 // pred_check
      _
    $region11: #{ffnn_forward.1} parent=1 // pred_check_branch
      %23 = sbr.rel (0) target = $region13
    $region12: #{ffnn_forward.1} parent=1 // pred_region
      %24 = dma.done [#allocation3], 2176
    $region13: #{ffnn_forward.1} parent=1 // pred_fallthru
      _
    %v25 = vld [vmem:[#allocation2] sm:$0xf]
    %v26 = vld [vmem:[#allocation2 + $0x4] sm:$0x1]
    %v27 = vld [vmem:[#allocation2 + $0x5] sm:$0x1]
    %v28 = vld [vmem:[#allocation2 + $0x8] sm:$0xff]
    %v29 = vld [vmem:[#allocation2 + $0x10] sm:$0xff]
    %v30 = vld [vmem:[#allocation2 + $0x18] sm:$0xff]
    %v31 = vld [vmem:[#allocation2 + $0x20] sm:$0xff]
    %v32 = vld [vmem:[#allocation2 + $0x28] sm:$0xff]
    %v33 = vld [vmem:[#allocation2 + $0x30] sm:$0xff]
    %v34 = vld [vmem:[#allocation2 + $0x38] sm:$0xff]
    %v35 = vld [vmem:[#allocation2 + $0x40] sm:$0xff]
    %v36 = vld [vmem:[#allocation2 + $0x48] sm:$0xff]
    %v37 = vld [vmem:[#allocation2 + $0x50] sm:$0xff]
    %v38 = vld [vmem:[#allocation2 + $0x58] sm:$0xff]
    %v39 = vld [vmem:[#allocation2 + $0x60] sm:$0xff]
    %v40 = vld [vmem:[#allocation2 + $0x68] sm:$0xff]
    %v41 = vld [vmem:[#allocation2 + $0x70] sm:$0xff]
    %v42 = vld [vmem:[#allocation2 + $0x78] sm:$0xff]
    %v43 = vld [vmem:[#allocation2 + $0x80] sm:$0xff]
    %v44 = vld [vmem:[%s0] sm:$0xff]
    %v45 = vld [vmem:[%s0 + $0x8] sm:$0xff]
    %v46 = vld [vmem:[%s0 + $0x10] sm:$0xff]
    %v47 = vld [vmem:[%s0 + $0x18] sm:$0xff]
    %v48 = vld [vmem:[%s0 + $0x20] sm:$0xff]
    %v49 = vld [vmem:[%s0 + $0x28] sm:$0xff]
    %v50 = vld [vmem:[%s0 + $0x30] sm:$0xff]
    %v51 = vld [vmem:[%s0 + $0x38] sm:$0xff]
    %v52 = vld [vmem:[%s0 + $0x40] sm:$0xff]
    %v53 = vld [vmem:[%s0 + $0x48] sm:$0xff]
    %v54 = vld [vmem:[%s0 + $0x50] sm:$0xff]
    %v55 = vld [vmem:[%s0 + $0x58] sm:$0xff]
    %v56 = vld [vmem:[%s0 + $0x60] sm:$0xf]
    %v57 = vlaneseq
    %v58 = vshrl.u32 %v57, 7
    %v59 = vsub.s32 0, %v58
    %v60 = vrot.slane %v26, %v59
    %vm61 = vcmask 31744
    %v63 = vsel %vm61, %v44, 0
    %v66 = vsel %vm61, %v45, 0
    %v69 = vsel %vm61, %v46, 0
    %v72 = vsel %vm61, %v47, 0
    %v75 = vsel %vm61, %v48, 0
    %v78 = vsel %vm61, %v49, 0
    %v81 = vsel %vm61, %v50, 0
    %v84 = vsel %vm61, %v51, 0
    %v87 = vsel %vm61, %v52, 0
    %v90 = vsel %vm61, %v53, 0
    %v93 = vsel %vm61, %v54, 0
    %v96 = vsel %vm61, %v55, 0
    %v99 = vsel %vm61, %v56, 0
    %vm101 = vcmask 1043456
    %v103 = vsel %vm101, %v25, 0
    %105 = vmatprep.subr.mxu0 0.0
    %v106 = vand.u32 %v103, 4294901760
    %107 = vmatpush1.msra.mxu0 %v106
    %108 = vmatprep.subr.mxu0 0.0
    %109 = vmatpush1.msra.mxu0 0.0
    %110 = vmatprep.subr.mxu0 0.0
    %111 = vmatpush1.msra.mxu0 0.0
    %112 = vmatprep.subr.mxu0 0.0
    %113 = vmatpush1.msra.mxu0 0.0
    %114 = vmatprep.subr.mxu0 0.0
    %115 = vmatpush1.msra.mxu0 0.0
    %116 = vmatprep.subr.mxu0 0.0
    %117 = vmatpush1.msra.mxu0 0.0
    %118 = vmatprep.subr.mxu0 0.0
    %119 = vmatpush1.msra.mxu0 0.0
    %120 = vmatprep.subr.mxu0 0.0
    %121 = vmatpush1.msra.mxu0 0.0
    %122 = vmatprep.subr.mxu0 0.0
    %123 = vmatpush1.msra.mxu0 0.0
    %124 = vmatprep.subr.mxu0 0.0
    %125 = vmatpush1.msra.mxu0 0.0
    %126 = vmatprep.subr.mxu0 0.0
    %127 = vmatpush1.msra.mxu0 0.0
    %128 = vmatprep.subr.mxu0 0.0
    %129 = vmatpush1.msra.mxu0 0.0
    %130 = vmatprep.subr.mxu0 0.0
    %131 = vmatpush1.msra.mxu0 0.0
    %132 = vmatprep.subr.mxu0 0.0
    %133 = vmatpush1.msra.mxu0 0.0
    %134 = vmatprep.subr.mxu0 0.0
    %135 = vmatpush1.msra.mxu0 0.0
    %136 = vmatprep.subr.mxu0 0.0
    %137 = vmatpush1.msra.mxu0 0.0
    %138 = vmatprep.subr.mxu0 0.0
    %139 = vmatpush1.msra.mxu0 0.0
    %140 = vmatprep.subr.mxu0 0.0
    %141 = vmatpush1.msra.mxu0 0.0
    %142 = vmatprep.subr.mxu0 0.0
    %143 = vmatpush1.msra.mxu0 0.0
    %144 = vmatprep.subr.mxu0 0.0
    %145 = vmatpush1.msra.mxu0 0.0
    %146 = vmatprep.subr.mxu0 0.0
    %147 = vmatpush1.msra.mxu0 0.0
    %148 = vmatprep.subr.mxu0 0.0
    %149 = vmatpush1.msra.mxu0 0.0
    %150 = vmatprep.subr.mxu0 0.0
    %151 = vmatpush1.msra.mxu0 0.0
    %152 = vmatprep.subr.mxu0 0.0
    %153 = vmatpush1.msra.mxu0 0.0
    %154 = vmatprep.subr.mxu0 0.0
    %155 = vmatpush1.msra.mxu0 0.0
    %156 = vmatprep.subr.mxu0 0.0
    %157 = vmatpush1.msra.mxu0 0.0
    %158 = vmatprep.subr.mxu0 0.0
    %159 = vmatpush1.msra.mxu0 0.0
    %160 = vmatprep.subr.mxu0 0.0
    %161 = vmatpush1.msra.mxu0 0.0
    %162 = vmatprep.subr.mxu0 0.0
    %163 = vmatpush1.msra.mxu0 0.0
    %164 = vmatprep.subr.mxu0 0.0
    %165 = vmatpush1.msra.mxu0 0.0
    %166 = vmatprep.subr.mxu0 0.0
    %167 = vmatpush1.msra.mxu0 0.0
    %168 = vmatprep.subr.mxu0 0.0
    %169 = vmatpush1.msra.mxu0 0.0
    %170 = vmatprep.mubr.f32.mxu0 0.0
    %v171 = vand.u32 %v63, 4294901760
    %v172 = vsub.f32 %v63, %v171
    %v173 = vand.u32 %v172, 4294901760
    %v174 = vsub.f32 %v172, %v173
    %v175 = vand.u32 %v174, 4294901760
    %176 = vmatmul.mubr.f32.gmra.mrb[0].mxu0 %v175
    %v177 = vpop.f32.mrb[0].mxu0
    %v178 = vadd.f32 %v60, %v177
    %v179 = vpop.f32.mrb[0].mxu0
    %180 = vmatprep.mubr.f32.mxu0 0.0
    %v181 = vand.u32 %v66, 4294901760
    %v182 = vsub.f32 %v66, %v181
    %v183 = vand.u32 %v182, 4294901760
    %v184 = vsub.f32 %v182, %v183
    %v185 = vand.u32 %v184, 4294901760
    %186 = vmatmul.mubr.f32.gmra.mrb[0].mxu0 %v185
    %v187 = vpop.f32.mrb[0].mxu0
    %v188 = vadd.f32 %v60, %v187
    %v189 = vpop.f32.mrb[0].mxu0
    %190 = vmatprep.mubr.f32.mxu0 0.0
    %v191 = vand.u32 %v69, 4294901760
    %v192 = vsub.f32 %v69, %v191
    %v193 = vand.u32 %v192, 4294901760
    %v194 = vsub.f32 %v192, %v193
    %v195 = vand.u32 %v194, 4294901760
    %196 = vmatmul.mubr.f32.gmra.mrb[0].mxu0 %v195
    %v197 = vpop.f32.mrb[0].mxu0
    %v198 = vadd.f32 %v60, %v197
    %v199 = vpop.f32.mrb[0].mxu0
    %200 = vmatprep.mubr.f32.mxu0 0.0
    %v201 = vand.u32 %v72, 4294901760
    %v202 = vsub.f32 %v72, %v201
    %v203 = vand.u32 %v202, 4294901760
    %v204 = vsub.f32 %v202, %v203
    %v205 = vand.u32 %v204, 4294901760
    %206 = vmatmul.mubr.f32.gmra.mrb[0].mxu0 %v205
    %v207 = vpop.f32.mrb[0].mxu0
    %v208 = vadd.f32 %v60, %v207
    %v209 = vpop.f32.mrb[0].mxu0
    %210 = vmatprep.mubr.f32.mxu0 0.0
    %v211 = vand.u32 %v75, 4294901760
    %v212 = vsub.f32 %v75, %v211
    %v213 = vand.u32 %v212, 4294901760
    %v214 = vsub.f32 %v212, %v213
    %v215 = vand.u32 %v214, 4294901760
    %216 = vmatmul.mubr.f32.gmra.mrb[0].mxu0 %v215
    %v217 = vpop.f32.mrb[0].mxu0
    %v218 = vadd.f32 %v60, %v217
    %v219 = vpop.f32.mrb[0].mxu0
    %220 = vmatprep.mubr.f32.mxu0 0.0
    %v221 = vand.u32 %v78, 4294901760
    %v222 = vsub.f32 %v78, %v221
    %v223 = vand.u32 %v222, 4294901760
    %v224 = vsub.f32 %v222, %v223
    %v225 = vand.u32 %v224, 4294901760
    %226 = vmatmul.mubr.f32.gmra.mrb[0].mxu0 %v225
    %v227 = vpop.f32.mrb[0].mxu0
    %v228 = vadd.f32 %v60, %v227
    %v229 = vpop.f32.mrb[0].mxu0
    %230 = vmatprep.mubr.f32.mxu0 0.0
    %v231 = vand.u32 %v81, 4294901760
    %v232 = vsub.f32 %v81, %v231
    %v233 = vand.u32 %v232, 4294901760
    %v234 = vsub.f32 %v232, %v233
    %v235 = vand.u32 %v234, 4294901760
    %236 = vmatmul.mubr.f32.gmra.mrb[0].mxu0 %v235
    %v237 = vpop.f32.mrb[0].mxu0
    %v238 = vadd.f32 %v60, %v237
    %v239 = vpop.f32.mrb[0].mxu0
    %240 = vmatprep.mubr.f32.mxu0 0.0
    %v241 = vand.u32 %v84, 4294901760
    %v242 = vsub.f32 %v84, %v241
    %v243 = vand.u32 %v242, 4294901760
    %v244 = vsub.f32 %v242, %v243
    %v245 = vand.u32 %v244, 4294901760
    %246 = vmatmul.mubr.f32.gmra.mrb[0].mxu0 %v245
    %v247 = vpop.f32.mrb[0].mxu0
    %v248 = vadd.f32 %v60, %v247
    %v249 = vpop.f32.mrb[0].mxu0
    %250 = vmatprep.mubr.f32.mxu0 0.0
    %v251 = vand.u32 %v87, 4294901760
    %v252 = vsub.f32 %v87, %v251
    %v253 = vand.u32 %v252, 4294901760
    %v254 = vsub.f32 %v252, %v253
    %v255 = vand.u32 %v254, 4294901760
    %256 = vmatmul.mubr.f32.gmra.mrb[0].mxu0 %v255
    %v257 = vpop.f32.mrb[0].mxu0
    %v258 = vadd.f32 %v60, %v257
    %v259 = vpop.f32.mrb[0].mxu0
    %260 = vmatprep.mubr.f32.mxu0 0.0
    %v261 = vand.u32 %v90, 4294901760
    %v262 = vsub.f32 %v90, %v261
    %v263 = vand.u32 %v262, 4294901760
    %v264 = vsub.f32 %v262, %v263
    %v265 = vand.u32 %v264, 4294901760
    %266 = vmatmul.mubr.f32.gmra.mrb[0].mxu0 %v265
    %v267 = vpop.f32.mrb[0].mxu0
    %v268 = vadd.f32 %v60, %v267
    %v269 = vpop.f32.mrb[0].mxu0
    %270 = vmatprep.mubr.f32.mxu0 0.0
    %v271 = vand.u32 %v93, 4294901760
    %v272 = vsub.f32 %v93, %v271
    %v273 = vand.u32 %v272, 4294901760
    %v274 = vsub.f32 %v272, %v273
    %v275 = vand.u32 %v274, 4294901760
    %276 = vmatmul.mubr.f32.gmra.mrb[0].mxu0 %v275
    %v277 = vpop.f32.mrb[0].mxu0
    %v278 = vadd.f32 %v60, %v277
    %v279 = vpop.f32.mrb[0].mxu0
    %280 = vmatprep.mubr.f32.mxu0 0.0
    %v281 = vand.u32 %v96, 4294901760
    %v282 = vsub.f32 %v96, %v281
    %v283 = vand.u32 %v282, 4294901760
    %v284 = vsub.f32 %v282, %v283
    %v285 = vand.u32 %v284, 4294901760
    %286 = vmatmul.mubr.f32.gmra.mrb[0].mxu0 %v285
    %v287 = vpop.f32.mrb[0].mxu0
    %v288 = vadd.f32 %v60, %v287
    %v289 = vpop.f32.mrb[0].mxu0
    %290 = vmatprep.mubr.f32.mxu0 0.0
    %v291 = vand.u32 %v99, 4294901760
    %v292 = vsub.f32 %v99, %v291
    %v293 = vand.u32 %v292, 4294901760
    %v294 = vsub.f32 %v292, %v293
    %v295 = vand.u32 %v294, 4294901760
    %296 = vmatmul.mubr.f32.gmra.mrb[0].mxu0 %v295
    %v297 = vpop.f32.mrb[0].mxu0
    %v298 = vadd.f32 %v60, %v297
    %v299 = vpop.f32.mrb[0].mxu0
    %300 = vdwg.mxu0
    %301 = vmatprep.subr.mxu0 0.0
    %v302 = vand.u32 %v103, 4294901760
    %v303 = vsub.f32 %v103, %v302
    %v304 = vand.u32 %v303, 4294901760
    %v305 = vsub.f32 %v303, %v304
    %v306 = vand.u32 %v305, 4294901760
    %307 = vmatpush1.msra.mxu0 %v306
    %308 = vmatprep.subr.mxu0 0.0
    %309 = vmatpush1.msra.mxu0 0.0
    %310 = vmatprep.subr.mxu0 0.0
    %311 = vmatpush1.msra.mxu0 0.0
    %312 = vmatprep.subr.mxu0 0.0
    %313 = vmatpush1.msra.mxu0 0.0
    %314 = vmatprep.subr.mxu0 0.0
    %315 = vmatpush1.msra.mxu0 0.0
    %316 = vmatprep.subr.mxu0 0.0
    %317 = vmatpush1.msra.mxu0 0.0
    %318 = vmatprep.subr.mxu0 0.0
    %319 = vmatpush1.msra.mxu0 0.0
    %320 = vmatprep.subr.mxu0 0.0
    %321 = vmatpush1.msra.mxu0 0.0
    %322 = vmatprep.subr.mxu0 0.0
    %323 = vmatpush1.msra.mxu0 0.0
    %324 = vmatprep.subr.mxu0 0.0
    %325 = vmatpush1.msra.mxu0 0.0
    %326 = vmatprep.subr.mxu0 0.0
    %327 = vmatpush1.msra.mxu0 0.0
    %328 = vmatprep.subr.mxu0 0.0
    %329 = vmatpush1.msra.mxu0 0.0
    %330 = vmatprep.subr.mxu0 0.0
    %331 = vmatpush1.msra.mxu0 0.0
    %332 = vmatprep.subr.mxu0 0.0
    %333 = vmatpush1.msra.mxu0 0.0
    %334 = vmatprep.subr.mxu0 0.0
    %335 = vmatpush1.msra.mxu0 0.0
    %336 = vmatprep.subr.mxu0 0.0
    %337 = vmatpush1.msra.mxu0 0.0
    %338 = vmatprep.subr.mxu0 0.0
    %339 = vmatpush1.msra.mxu0 0.0
    %340 = vmatprep.subr.mxu0 0.0
    %341 = vmatpush1.msra.mxu0 0.0
    %342 = vmatprep.subr.mxu0 0.0
    %343 = vmatpush1.msra.mxu0 0.0
    %344 = vmatprep.subr.mxu0 0.0
    %345 = vmatpush1.msra.mxu0 0.0
    %346 = vmatprep.subr.mxu0 0.0
    %347 = vmatpush1.msra.mxu0 0.0
    %348 = vmatprep.subr.mxu0 0.0
    %349 = vmatpush1.msra.mxu0 0.0
    %350 = vmatprep.subr.mxu0 0.0
    %351 = vmatpush1.msra.mxu0 0.0
    %352 = vmatprep.subr.mxu0 0.0
    %353 = vmatpush1.msra.mxu0 0.0
    %354 = vmatprep.subr.mxu0 0.0
    %355 = vmatpush1.msra.mxu0 0.0
    %356 = vmatprep.subr.mxu0 0.0
    %357 = vmatpush1.msra.mxu0 0.0
    %358 = vmatprep.subr.mxu0 0.0
    %359 = vmatpush1.msra.mxu0 0.0
    %360 = vmatprep.subr.mxu0 0.0
    %361 = vmatpush1.msra.mxu0 0.0
    %362 = vmatprep.subr.mxu0 0.0
    %363 = vmatpush1.msra.mxu0 0.0
    %364 = vmatprep.subr.mxu0 0.0
    %365 = vmatpush1.msra.mxu0 0.0
    %366 = vmatprep.subr.mxu0 0.0
    %367 = vmatpush1.msra.mxu0 0.0
    %368 = vmatprep.subr.mxu0 0.0
    %369 = vmatpush1.msra.mxu0 0.0
    %370 = vmatprep.mubr.f32.mxu0 0.0
    %v371 = vand.u32 %v63, 4294901760
    %372 = vmatmul.mubr.f32.gmra.mrb[0].mxu0 %v371
    %v373 = vpop.f32.mrb[0].mxu0
    %v374 = vadd.f32 %v178, %v373
    %v375 = vpop.f32.mrb[0].mxu0
    %376 = vmatprep.mubr.f32.mxu0 0.0
    %v377 = vand.u32 %v66, 4294901760
    %378 = vmatmul.mubr.f32.gmra.mrb[0].mxu0 %v377
    %v379 = vpop.f32.mrb[0].mxu0
    %v380 = vadd.f32 %v188, %v379
    %v381 = vpop.f32.mrb[0].mxu0
    %382 = vmatprep.mubr.f32.mxu0 0.0
    %v383 = vand.u32 %v69, 4294901760
    %384 = vmatmul.mubr.f32.gmra.mrb[0].mxu0 %v383
    %v385 = vpop.f32.mrb[0].mxu0
    %v386 = vadd.f32 %v198, %v385
    %v387 = vpop.f32.mrb[0].mxu0
    %388 = vmatprep.mubr.f32.mxu0 0.0
    %v389 = vand.u32 %v72, 4294901760
    %390 = vmatmul.mubr.f32.gmra.mrb[0].mxu0 %v389
    %v391 = vpop.f32.mrb[0].mxu0
    %v392 = vadd.f32 %v208, %v391
    %v393 = vpop.f32.mrb[0].mxu0
    %394 = vmatprep.mubr.f32.mxu0 0.0
    %v395 = vand.u32 %v75, 4294901760
    %396 = vmatmul.mubr.f32.gmra.mrb[0].mxu0 %v395
    %v397 = vpop.f32.mrb[0].mxu0
    %v398 = vadd.f32 %v218, %v397
    %v399 = vpop.f32.mrb[0].mxu0
    %400 = vmatprep.mubr.f32.mxu0 0.0
    %v401 = vand.u32 %v78, 4294901760
    %402 = vmatmul.mubr.f32.gmra.mrb[0].mxu0 %v401
    %v403 = vpop.f32.mrb[0].mxu0
    %v404 = vadd.f32 %v228, %v403
    %v405 = vpop.f32.mrb[0].mxu0
    %406 = vmatprep.mubr.f32.mxu0 0.0
    %v407 = vand.u32 %v81, 4294901760
    %408 = vmatmul.mubr.f32.gmra.mrb[0].mxu0 %v407
    %v409 = vpop.f32.mrb[0].mxu0
    %v410 = vadd.f32 %v238, %v409
    %v411 = vpop.f32.mrb[0].mxu0
    %412 = vmatprep.mubr.f32.mxu0 0.0
    %v413 = vand.u32 %v84, 4294901760
    %414 = vmatmul.mubr.f32.gmra.mrb[0].mxu0 %v413
    %v415 = vpop.f32.mrb[0].mxu0
    %v416 = vadd.f32 %v248, %v415
    %v417 = vpop.f32.mrb[0].mxu0
    %418 = vmatprep.mubr.f32.mxu0 0.0
    %v419 = vand.u32 %v87, 4294901760
    %420 = vmatmul.mubr.f32.gmra.mrb[0].mxu0 %v419
    %v421 = vpop.f32.mrb[0].mxu0
    %v422 = vadd.f32 %v258, %v421
    %v423 = vpop.f32.mrb[0].mxu0
    %424 = vmatprep.mubr.f32.mxu0 0.0
    %v425 = vand.u32 %v90, 4294901760
    %426 = vmatmul.mubr.f32.gmra.mrb[0].mxu0 %v425
    %v427 = vpop.f32.mrb[0].mxu0
    %v428 = vadd.f32 %v268, %v427
    %v429 = vpop.f32.mrb[0].mxu0
    %430 = vmatprep.mubr.f32.mxu0 0.0
    %v431 = vand.u32 %v93, 4294901760
    %432 = vmatmul.mubr.f32.gmra.mrb[0].mxu0 %v431
    %v433 = vpop.f32.mrb[0].mxu0
    %v434 = vadd.f32 %v278, %v433
    %v435 = vpop.f32.mrb[0].mxu0
    %436 = vmatprep.mubr.f32.mxu0 0.0
    %v437 = vand.u32 %v96, 4294901760
    %438 = vmatmul.mubr.f32.gmra.mrb[0].mxu0 %v437
    %v439 = vpop.f32.mrb[0].mxu0
    %v440 = vadd.f32 %v288, %v439
    %v441 = vpop.f32.mrb[0].mxu0
    %442 = vmatprep.mubr.f32.mxu0 0.0
    %v443 = vand.u32 %v99, 4294901760
    %444 = vmatmul.mubr.f32.gmra.mrb[0].mxu0 %v443
    %v445 = vpop.f32.mrb[0].mxu0
    %v446 = vadd.f32 %v298, %v445
    %v447 = vpop.f32.mrb[0].mxu0
    %448 = vdwg.mxu0
    %449 = vmatprep.subr.mxu0 0.0
    %v450 = vand.u32 %v103, 4294901760
    %v451 = vsub.f32 %v103, %v450
    %452 = vmatpush1.msra.mxu0 %v451
    %453 = vmatprep.subr.mxu0 0.0
    %454 = vmatpush1.msra.mxu0 0.0
    %455 = vmatprep.subr.mxu0 0.0
    %456 = vmatpush1.msra.mxu0 0.0
    %457 = vmatprep.subr.mxu0 0.0
    %458 = vmatpush1.msra.mxu0 0.0
    %459 = vmatprep.subr.mxu0 0.0
    %460 = vmatpush1.msra.mxu0 0.0
    %461 = vmatprep.subr.mxu0 0.0
    %462 = vmatpush1.msra.mxu0 0.0
    %463 = vmatprep.subr.mxu0 0.0
    %464 = vmatpush1.msra.mxu0 0.0
    %465 = vmatprep.subr.mxu0 0.0
    %466 = vmatpush1.msra.mxu0 0.0
    %467 = vmatprep.subr.mxu0 0.0
    %468 = vmatpush1.msra.mxu0 0.0
    %469 = vmatprep.subr.mxu0 0.0
    %470 = vmatpush1.msra.mxu0 0.0
    %471 = vmatprep.subr.mxu0 0.0
    %472 = vmatpush1.msra.mxu0 0.0
    %473 = vmatprep.subr.mxu0 0.0
    %474 = vmatpush1.msra.mxu0 0.0
    %475 = vmatprep.subr.mxu0 0.0
    %476 = vmatpush1.msra.mxu0 0.0
    %477 = vmatprep.subr.mxu0 0.0
    %478 = vmatpush1.msra.mxu0 0.0
    %479 = vmatprep.subr.mxu0 0.0
    %480 = vmatpush1.msra.mxu0 0.0
    %481 = vmatprep.subr.mxu0 0.0
    %482 = vmatpush1.msra.mxu0 0.0
    %483 = vmatprep.subr.mxu0 0.0
    %484 = vmatpush1.msra.mxu0 0.0
    %485 = vmatprep.subr.mxu0 0.0
    %486 = vmatpush1.msra.mxu0 0.0
    %487 = vmatprep.subr.mxu0 0.0
    %488 = vmatpush1.msra.mxu0 0.0
    %489 = vmatprep.subr.mxu0 0.0
    %490 = vmatpush1.msra.mxu0 0.0
    %491 = vmatprep.subr.mxu0 0.0
    %492 = vmatpush1.msra.mxu0 0.0
    %493 = vmatprep.subr.mxu0 0.0
    %494 = vmatpush1.msra.mxu0 0.0
    %495 = vmatprep.subr.mxu0 0.0
    %496 = vmatpush1.msra.mxu0 0.0
    %497 = vmatprep.subr.mxu0 0.0
    %498 = vmatpush1.msra.mxu0 0.0
    %499 = vmatprep.subr.mxu0 0.0
    %500 = vmatpush1.msra.mxu0 0.0
    %501 = vmatprep.subr.mxu0 0.0
    %502 = vmatpush1.msra.mxu0 0.0
    %503 = vmatprep.subr.mxu0 0.0
    %504 = vmatpush1.msra.mxu0 0.0
    %505 = vmatprep.subr.mxu0 0.0
    %506 = vmatpush1.msra.mxu0 0.0
    %507 = vmatprep.subr.mxu0 0.0
    %508 = vmatpush1.msra.mxu0 0.0
    %509 = vmatprep.subr.mxu0 0.0
    %510 = vmatpush1.msra.mxu0 0.0
    %511 = vmatprep.subr.mxu0 0.0
    %512 = vmatpush1.msra.mxu0 0.0
    %513 = vmatprep.subr.mxu0 0.0
    %514 = vmatpush1.msra.mxu0 0.0
    %515 = vmatprep.mubr.f32.mxu0 0.0
    %v516 = vand.u32 %v63, 4294901760
    %v517 = vsub.f32 %v63, %v516
    %518 = vmatmul.mubr.f32.gmra.mrb[0].mxu0 %v517
    %v519 = vpop.f32.mrb[0].mxu0
    %v520 = vadd.f32 %v374, %v519
    %v521 = vpop.f32.mrb[0].mxu0
    %522 = vmatprep.mubr.f32.mxu0 0.0
    %v523 = vand.u32 %v66, 4294901760
    %v524 = vsub.f32 %v66, %v523
    %525 = vmatmul.mubr.f32.gmra.mrb[0].mxu0 %v524
    %v526 = vpop.f32.mrb[0].mxu0
    %v527 = vadd.f32 %v380, %v526
    %v528 = vpop.f32.mrb[0].mxu0
    %529 = vmatprep.mubr.f32.mxu0 0.0
    %v530 = vand.u32 %v69, 4294901760
    %v531 = vsub.f32 %v69, %v530
    %532 = vmatmul.mubr.f32.gmra.mrb[0].mxu0 %v531
    %v533 = vpop.f32.mrb[0].mxu0
    %v534 = vadd.f32 %v386, %v533
    %v535 = vpop.f32.mrb[0].mxu0
    %536 = vmatprep.mubr.f32.mxu0 0.0
    %v537 = vand.u32 %v72, 4294901760
    %v538 = vsub.f32 %v72, %v537
    %539 = vmatmul.mubr.f32.gmra.mrb[0].mxu0 %v538
    %v540 = vpop.f32.mrb[0].mxu0
    %v541 = vadd.f32 %v392, %v540
    %v542 = vpop.f32.mrb[0].mxu0
    %543 = vmatprep.mubr.f32.mxu0 0.0
    %v544 = vand.u32 %v75, 4294901760
    %v545 = vsub.f32 %v75, %v544
    %546 = vmatmul.mubr.f32.gmra.mrb[0].mxu0 %v545
    %v547 = vpop.f32.mrb[0].mxu0
    %v548 = vadd.f32 %v398, %v547
    %v549 = vpop.f32.mrb[0].mxu0
    %550 = vmatprep.mubr.f32.mxu0 0.0
    %v551 = vand.u32 %v78, 4294901760
    %v552 = vsub.f32 %v78, %v551
    %553 = vmatmul.mubr.f32.gmra.mrb[0].mxu0 %v552
    %v554 = vpop.f32.mrb[0].mxu0
    %v555 = vadd.f32 %v404, %v554
    %v556 = vpop.f32.mrb[0].mxu0
    %557 = vmatprep.mubr.f32.mxu0 0.0
    %v558 = vand.u32 %v81, 4294901760
    %v559 = vsub.f32 %v81, %v558
    %560 = vmatmul.mubr.f32.gmra.mrb[0].mxu0 %v559
    %v561 = vpop.f32.mrb[0].mxu0
    %v562 = vadd.f32 %v410, %v561
    %v563 = vpop.f32.mrb[0].mxu0
    %564 = vmatprep.mubr.f32.mxu0 0.0
    %v565 = vand.u32 %v84, 4294901760
    %v566 = vsub.f32 %v84, %v565
    %567 = vmatmul.mubr.f32.gmra.mrb[0].mxu0 %v566
    %v568 = vpop.f32.mrb[0].mxu0
    %v569 = vadd.f32 %v416, %v568
    %v570 = vpop.f32.mrb[0].mxu0
    %571 = vmatprep.mubr.f32.mxu0 0.0
    %v572 = vand.u32 %v87, 4294901760
    %v573 = vsub.f32 %v87, %v572
    %574 = vmatmul.mubr.f32.gmra.mrb[0].mxu0 %v573
    %v575 = vpop.f32.mrb[0].mxu0
    %v576 = vadd.f32 %v422, %v575
    %v577 = vpop.f32.mrb[0].mxu0
    %578 = vmatprep.mubr.f32.mxu0 0.0
    %v579 = vand.u32 %v90, 4294901760
    %v580 = vsub.f32 %v90, %v579
    %581 = vmatmul.mubr.f32.gmra.mrb[0].mxu0 %v580
    %v582 = vpop.f32.mrb[0].mxu0
    %v583 = vadd.f32 %v428, %v582
    %v584 = vpop.f32.mrb[0].mxu0
    %585 = vmatprep.mubr.f32.mxu0 0.0
    %v586 = vand.u32 %v93, 4294901760
    %v587 = vsub.f32 %v93, %v586
    %588 = vmatmul.mubr.f32.gmra.mrb[0].mxu0 %v587
    %v589 = vpop.f32.mrb[0].mxu0
    %v590 = vadd.f32 %v434, %v589
    %v591 = vpop.f32.mrb[0].mxu0
    %592 = vmatprep.mubr.f32.mxu0 0.0
    %v593 = vand.u32 %v96, 4294901760
    %v594 = vsub.f32 %v96, %v593
    %595 = vmatmul.mubr.f32.gmra.mrb[0].mxu0 %v594
    %v596 = vpop.f32.mrb[0].mxu0
    %v597 = vadd.f32 %v440, %v596
    %v598 = vpop.f32.mrb[0].mxu0
    %599 = vmatprep.mubr.f32.mxu0 0.0
    %v600 = vand.u32 %v99, 4294901760
    %v601 = vsub.f32 %v99, %v600
    %602 = vmatmul.mubr.f32.gmra.mrb[0].mxu0 %v601
    %v603 = vpop.f32.mrb[0].mxu0
    %v604 = vadd.f32 %v446, %v603
    %v605 = vpop.f32.mrb[0].mxu0
    %606 = vdwg.mxu0
    %607 = vmatprep.subr.mxu0 0.0
    %v608 = vand.u32 %v103, 4294901760
    %609 = vmatpush1.msra.mxu0 %v608
    %610 = vmatprep.subr.mxu0 0.0
    %611 = vmatpush1.msra.mxu0 0.0
    %612 = vmatprep.subr.mxu0 0.0
    %613 = vmatpush1.msra.mxu0 0.0
    %614 = vmatprep.subr.mxu0 0.0
    %615 = vmatpush1.msra.mxu0 0.0
    %616 = vmatprep.subr.mxu0 0.0
    %617 = vmatpush1.msra.mxu0 0.0
    %618 = vmatprep.subr.mxu0 0.0
    %619 = vmatpush1.msra.mxu0 0.0
    %620 = vmatprep.subr.mxu0 0.0
    %621 = vmatpush1.msra.mxu0 0.0
    %622 = vmatprep.subr.mxu0 0.0
    %623 = vmatpush1.msra.mxu0 0.0
    %624 = vmatprep.subr.mxu0 0.0
    %625 = vmatpush1.msra.mxu0 0.0
    %626 = vmatprep.subr.mxu0 0.0
    %627 = vmatpush1.msra.mxu0 0.0
    %628 = vmatprep.subr.mxu0 0.0
    %629 = vmatpush1.msra.mxu0 0.0
    %630 = vmatprep.subr.mxu0 0.0
    %631 = vmatpush1.msra.mxu0 0.0
    %632 = vmatprep.subr.mxu0 0.0
    %633 = vmatpush1.msra.mxu0 0.0
    %634 = vmatprep.subr.mxu0 0.0
    %635 = vmatpush1.msra.mxu0 0.0
    %636 = vmatprep.subr.mxu0 0.0
    %637 = vmatpush1.msra.mxu0 0.0
    %638 = vmatprep.subr.mxu0 0.0
    %639 = vmatpush1.msra.mxu0 0.0
    %640 = vmatprep.subr.mxu0 0.0
    %641 = vmatpush1.msra.mxu0 0.0
    %642 = vmatprep.subr.mxu0 0.0
    %643 = vmatpush1.msra.mxu0 0.0
    %644 = vmatprep.subr.mxu0 0.0
    %645 = vmatpush1.msra.mxu0 0.0
    %646 = vmatprep.subr.mxu0 0.0
    %647 = vmatpush1.msra.mxu0 0.0
    %648 = vmatprep.subr.mxu0 0.0
    %649 = vmatpush1.msra.mxu0 0.0
    %650 = vmatprep.subr.mxu0 0.0
    %651 = vmatpush1.msra.mxu0 0.0
    %652 = vmatprep.subr.mxu0 0.0
    %653 = vmatpush1.msra.mxu0 0.0
    %654 = vmatprep.subr.mxu0 0.0
    %655 = vmatpush1.msra.mxu0 0.0
    %656 = vmatprep.subr.mxu0 0.0
    %657 = vmatpush1.msra.mxu0 0.0
    %658 = vmatprep.subr.mxu0 0.0
    %659 = vmatpush1.msra.mxu0 0.0
    %660 = vmatprep.subr.mxu0 0.0
    %661 = vmatpush1.msra.mxu0 0.0
    %662 = vmatprep.subr.mxu0 0.0
    %663 = vmatpush1.msra.mxu0 0.0
    %664 = vmatprep.subr.mxu0 0.0
    %665 = vmatpush1.msra.mxu0 0.0
    %666 = vmatprep.subr.mxu0 0.0
    %667 = vmatpush1.msra.mxu0 0.0
    %668 = vmatprep.subr.mxu0 0.0
    %669 = vmatpush1.msra.mxu0 0.0
    %670 = vmatprep.subr.mxu0 0.0
    %671 = vmatpush1.msra.mxu0 0.0
    %672 = vmatprep.mubr.f32.mxu0 0.0
    %v673 = vand.u32 %v63, 4294901760
    %v674 = vsub.f32 %v63, %v673
    %v675 = vand.u32 %v674, 4294901760
    %676 = vmatmul.mubr.f32.gmra.mrb[0].mxu0 %v675
    %v677 = vpop.f32.mrb[0].mxu0
    %v678 = vadd.f32 %v520, %v677
    %v679 = vpop.f32.mrb[0].mxu0
    %680 = vmatprep.mubr.f32.mxu0 0.0
    %v681 = vand.u32 %v66, 4294901760
    %v682 = vsub.f32 %v66, %v681
    %v683 = vand.u32 %v682, 4294901760
    %684 = vmatmul.mubr.f32.gmra.mrb[0].mxu0 %v683
    %v685 = vpop.f32.mrb[0].mxu0
    %v686 = vadd.f32 %v527, %v685
    %v687 = vpop.f32.mrb[0].mxu0
    %688 = vmatprep.mubr.f32.mxu0 0.0
    %v689 = vand.u32 %v69, 4294901760
    %v690 = vsub.f32 %v69, %v689
    %v691 = vand.u32 %v690, 4294901760
    %692 = vmatmul.mubr.f32.gmra.mrb[0].mxu0 %v691
    %v693 = vpop.f32.mrb[0].mxu0
    %v694 = vadd.f32 %v534, %v693
    %v695 = vpop.f32.mrb[0].mxu0
    %696 = vmatprep.mubr.f32.mxu0 0.0
    %v697 = vand.u32 %v72, 4294901760
    %v698 = vsub.f32 %v72, %v697
    %v699 = vand.u32 %v698, 4294901760
    %700 = vmatmul.mubr.f32.gmra.mrb[0].mxu0 %v699
    %v701 = vpop.f32.mrb[0].mxu0
    %v702 = vadd.f32 %v541, %v701
    %v703 = vpop.f32.mrb[0].mxu0
    %704 = vmatprep.mubr.f32.mxu0 0.0
    %v705 = vand.u32 %v75, 4294901760
    %v706 = vsub.f32 %v75, %v705
    %v707 = vand.u32 %v706, 4294901760
    %708 = vmatmul.mubr.f32.gmra.mrb[0].mxu0 %v707
    %v709 = vpop.f32.mrb[0].mxu0
    %v710 = vadd.f32 %v548, %v709
    %v711 = vpop.f32.mrb[0].mxu0
    %712 = vmatprep.mubr.f32.mxu0 0.0
    %v713 = vand.u32 %v78, 4294901760
    %v714 = vsub.f32 %v78, %v713
    %v715 = vand.u32 %v714, 4294901760
    %716 = vmatmul.mubr.f32.gmra.mrb[0].mxu0 %v715
    %v717 = vpop.f32.mrb[0].mxu0
    %v718 = vadd.f32 %v555, %v717
    %v719 = vpop.f32.mrb[0].mxu0
    %720 = vmatprep.mubr.f32.mxu0 0.0
    %v721 = vand.u32 %v81, 4294901760
    %v722 = vsub.f32 %v81, %v721
    %v723 = vand.u32 %v722, 4294901760
    %724 = vmatmul.mubr.f32.gmra.mrb[0].mxu0 %v723
    %v725 = vpop.f32.mrb[0].mxu0
    %v726 = vadd.f32 %v562, %v725
    %v727 = vpop.f32.mrb[0].mxu0
    %728 = vmatprep.mubr.f32.mxu0 0.0
    %v729 = vand.u32 %v84, 4294901760
    %v730 = vsub.f32 %v84, %v729
    %v731 = vand.u32 %v730, 4294901760
    %732 = vmatmul.mubr.f32.gmra.mrb[0].mxu0 %v731
    %v733 = vpop.f32.mrb[0].mxu0
    %v734 = vadd.f32 %v569, %v733
    %v735 = vpop.f32.mrb[0].mxu0
    %736 = vmatprep.mubr.f32.mxu0 0.0
    %v737 = vand.u32 %v87, 4294901760
    %v738 = vsub.f32 %v87, %v737
    %v739 = vand.u32 %v738, 4294901760
    %740 = vmatmul.mubr.f32.gmra.mrb[0].mxu0 %v739
    %v741 = vpop.f32.mrb[0].mxu0
    %v742 = vadd.f32 %v576, %v741
    %v743 = vpop.f32.mrb[0].mxu0
    %744 = vmatprep.mubr.f32.mxu0 0.0
    %v745 = vand.u32 %v90, 4294901760
    %v746 = vsub.f32 %v90, %v745
    %v747 = vand.u32 %v746, 4294901760
    %748 = vmatmul.mubr.f32.gmra.mrb[0].mxu0 %v747
    %v749 = vpop.f32.mrb[0].mxu0
    %v750 = vadd.f32 %v583, %v749
    %v751 = vpop.f32.mrb[0].mxu0
    %752 = vmatprep.mubr.f32.mxu0 0.0
    %v753 = vand.u32 %v93, 4294901760
    %v754 = vsub.f32 %v93, %v753
    %v755 = vand.u32 %v754, 4294901760
    %756 = vmatmul.mubr.f32.gmra.mrb[0].mxu0 %v755
    %v757 = vpop.f32.mrb[0].mxu0
    %v758 = vadd.f32 %v590, %v757
    %v759 = vpop.f32.mrb[0].mxu0
    %760 = vmatprep.mubr.f32.mxu0 0.0
    %v761 = vand.u32 %v96, 4294901760
    %v762 = vsub.f32 %v96, %v761
    %v763 = vand.u32 %v762, 4294901760
    %764 = vmatmul.mubr.f32.gmra.mrb[0].mxu0 %v763
    %v765 = vpop.f32.mrb[0].mxu0
    %v766 = vadd.f32 %v597, %v765
    %v767 = vpop.f32.mrb[0].mxu0
    %768 = vmatprep.mubr.f32.mxu0 0.0
    %v769 = vand.u32 %v99, 4294901760
    %v770 = vsub.f32 %v99, %v769
    %v771 = vand.u32 %v770, 4294901760
    %772 = vmatmul.mubr.f32.gmra.mrb[0].mxu0 %v771
    %v773 = vpop.f32.mrb[0].mxu0
    %v774 = vadd.f32 %v604, %v773
    %v775 = vpop.f32.mrb[0].mxu0
    %776 = vdwg.mxu0
    %777 = vmatprep.subr.mxu0 0.0
    %v778 = vand.u32 %v103, 4294901760
    %v779 = vsub.f32 %v103, %v778
    %v780 = vand.u32 %v779, 4294901760
    %781 = vmatpush1.msra.mxu0 %v780
    %782 = vmatprep.subr.mxu0 0.0
    %783 = vmatpush1.msra.mxu0 0.0
    %784 = vmatprep.subr.mxu0 0.0
    %785 = vmatpush1.msra.mxu0 0.0
    %786 = vmatprep.subr.mxu0 0.0
    %787 = vmatpush1.msra.mxu0 0.0
    %788 = vmatprep.subr.mxu0 0.0
    %789 = vmatpush1.msra.mxu0 0.0
    %790 = vmatprep.subr.mxu0 0.0
    %791 = vmatpush1.msra.mxu0 0.0
    %792 = vmatprep.subr.mxu0 0.0
    %793 = vmatpush1.msra.mxu0 0.0
    %794 = vmatprep.subr.mxu0 0.0
    %795 = vmatpush1.msra.mxu0 0.0
    %796 = vmatprep.subr.mxu0 0.0
    %797 = vmatpush1.msra.mxu0 0.0
    %798 = vmatprep.subr.mxu0 0.0
    %799 = vmatpush1.msra.mxu0 0.0
    %800 = vmatprep.subr.mxu0 0.0
    %801 = vmatpush1.msra.mxu0 0.0
    %802 = vmatprep.subr.mxu0 0.0
    %803 = vmatpush1.msra.mxu0 0.0
    %804 = vmatprep.subr.mxu0 0.0
    %805 = vmatpush1.msra.mxu0 0.0
    %806 = vmatprep.subr.mxu0 0.0
    %807 = vmatpush1.msra.mxu0 0.0
    %808 = vmatprep.subr.mxu0 0.0
    %809 = vmatpush1.msra.mxu0 0.0
    %810 = vmatprep.subr.mxu0 0.0
    %811 = vmatpush1.msra.mxu0 0.0
    %812 = vmatprep.subr.mxu0 0.0
    %813 = vmatpush1.msra.mxu0 0.0
    %814 = vmatprep.subr.mxu0 0.0
    %815 = vmatpush1.msra.mxu0 0.0
    %816 = vmatprep.subr.mxu0 0.0
    %817 = vmatpush1.msra.mxu0 0.0
    %818 = vmatprep.subr.mxu0 0.0
    %819 = vmatpush1.msra.mxu0 0.0
    %820 = vmatprep.subr.mxu0 0.0
    %821 = vmatpush1.msra.mxu0 0.0
    %822 = vmatprep.subr.mxu0 0.0
    %823 = vmatpush1.msra.mxu0 0.0
    %824 = vmatprep.subr.mxu0 0.0
    %825 = vmatpush1.msra.mxu0 0.0
    %826 = vmatprep.subr.mxu0 0.0
    %827 = vmatpush1.msra.mxu0 0.0
    %828 = vmatprep.subr.mxu0 0.0
    %829 = vmatpush1.msra.mxu0 0.0
    %830 = vmatprep.subr.mxu0 0.0
    %831 = vmatpush1.msra.mxu0 0.0
    %832 = vmatprep.subr.mxu0 0.0
    %833 = vmatpush1.msra.mxu0 0.0
    %834 = vmatprep.subr.mxu0 0.0
    %835 = vmatpush1.msra.mxu0 0.0
    %836 = vmatprep.subr.mxu0 0.0
    %837 = vmatpush1.msra.mxu0 0.0
    %838 = vmatprep.subr.mxu0 0.0
    %839 = vmatpush1.msra.mxu0 0.0
    %840 = vmatprep.subr.mxu0 0.0
    %841 = vmatpush1.msra.mxu0 0.0
    %842 = vmatprep.subr.mxu0 0.0
    %843 = vmatpush1.msra.mxu0 0.0
    %844 = vmatprep.mubr.f32.mxu0 0.0
    %v845 = vand.u32 %v63, 4294901760
    %846 = vmatmul.mubr.f32.gmra.mrb[0].mxu0 %v845
    %v847 = vpop.f32.mrb[0].mxu0
    %v848 = vadd.f32 %v678, %v847
    %v849 = vpop.f32.mrb[0].mxu0
    %850 = vmatprep.mubr.f32.mxu0 0.0
    %v851 = vand.u32 %v66, 4294901760
    %852 = vmatmul.mubr.f32.gmra.mrb[0].mxu0 %v851
    %v853 = vpop.f32.mrb[0].mxu0
    %v854 = vadd.f32 %v686, %v853
    %v855 = vpop.f32.mrb[0].mxu0
    %856 = vmatprep.mubr.f32.mxu0 0.0
    %v857 = vand.u32 %v69, 4294901760
    %858 = vmatmul.mubr.f32.gmra.mrb[0].mxu0 %v857
    %v859 = vpop.f32.mrb[0].mxu0
    %v860 = vadd.f32 %v694, %v859
    %v861 = vpop.f32.mrb[0].mxu0
    %862 = vmatprep.mubr.f32.mxu0 0.0
    %v863 = vand.u32 %v72, 4294901760
    %864 = vmatmul.mubr.f32.gmra.mrb[0].mxu0 %v863
    %v865 = vpop.f32.mrb[0].mxu0
    %v866 = vadd.f32 %v702, %v865
    %v867 = vpop.f32.mrb[0].mxu0
    %868 = vmatprep.mubr.f32.mxu0 0.0
    %v869 = vand.u32 %v75, 4294901760
    %870 = vmatmul.mubr.f32.gmra.mrb[0].mxu0 %v869
    %v871 = vpop.f32.mrb[0].mxu0
    %v872 = vadd.f32 %v710, %v871
    %v873 = vpop.f32.mrb[0].mxu0
    %874 = vmatprep.mubr.f32.mxu0 0.0
    %v875 = vand.u32 %v78, 4294901760
    %876 = vmatmul.mubr.f32.gmra.mrb[0].mxu0 %v875
    %v877 = vpop.f32.mrb[0].mxu0
    %v878 = vadd.f32 %v718, %v877
    %v879 = vpop.f32.mrb[0].mxu0
    %880 = vmatprep.mubr.f32.mxu0 0.0
    %v881 = vand.u32 %v81, 4294901760
    %882 = vmatmul.mubr.f32.gmra.mrb[0].mxu0 %v881
    %v883 = vpop.f32.mrb[0].mxu0
    %v884 = vadd.f32 %v726, %v883
    %v885 = vpop.f32.mrb[0].mxu0
    %886 = vmatprep.mubr.f32.mxu0 0.0
    %v887 = vand.u32 %v84, 4294901760
    %888 = vmatmul.mubr.f32.gmra.mrb[0].mxu0 %v887
    %v889 = vpop.f32.mrb[0].mxu0
    %v890 = vadd.f32 %v734, %v889
    %v891 = vpop.f32.mrb[0].mxu0
    %892 = vmatprep.mubr.f32.mxu0 0.0
    %v893 = vand.u32 %v87, 4294901760
    %894 = vmatmul.mubr.f32.gmra.mrb[0].mxu0 %v893
    %v895 = vpop.f32.mrb[0].mxu0
    %v896 = vadd.f32 %v742, %v895
    %v897 = vpop.f32.mrb[0].mxu0
    %898 = vmatprep.mubr.f32.mxu0 0.0
    %v899 = vand.u32 %v90, 4294901760
    %900 = vmatmul.mubr.f32.gmra.mrb[0].mxu0 %v899
    %v901 = vpop.f32.mrb[0].mxu0
    %v902 = vadd.f32 %v750, %v901
    %v903 = vpop.f32.mrb[0].mxu0
    %904 = vmatprep.mubr.f32.mxu0 0.0
    %v905 = vand.u32 %v93, 4294901760
    %906 = vmatmul.mubr.f32.gmra.mrb[0].mxu0 %v905
    %v907 = vpop.f32.mrb[0].mxu0
    %v908 = vadd.f32 %v758, %v907
    %v909 = vpop.f32.mrb[0].mxu0
    %910 = vmatprep.mubr.f32.mxu0 0.0
    %v911 = vand.u32 %v96, 4294901760
    %912 = vmatmul.mubr.f32.gmra.mrb[0].mxu0 %v911
    %v913 = vpop.f32.mrb[0].mxu0
    %v914 = vadd.f32 %v766, %v913
    %v915 = vpop.f32.mrb[0].mxu0
    %916 = vmatprep.mubr.f32.mxu0 0.0
    %v917 = vand.u32 %v99, 4294901760
    %918 = vmatmul.mubr.f32.gmra.mrb[0].mxu0 %v917
    %v919 = vpop.f32.mrb[0].mxu0
    %v920 = vadd.f32 %v774, %v919
    %v921 = vpop.f32.mrb[0].mxu0
    %922 = vdwg.mxu0
    %923 = vmatprep.subr.mxu0 0.0
    %v924 = vand.u32 %v103, 4294901760
    %925 = vmatpush1.msra.mxu0 %v924
    %926 = vmatprep.subr.mxu0 0.0
    %927 = vmatpush1.msra.mxu0 0.0
    %928 = vmatprep.subr.mxu0 0.0
    %929 = vmatpush1.msra.mxu0 0.0
    %930 = vmatprep.subr.mxu0 0.0
    %931 = vmatpush1.msra.mxu0 0.0
    %932 = vmatprep.subr.mxu0 0.0
    %933 = vmatpush1.msra.mxu0 0.0
    %934 = vmatprep.subr.mxu0 0.0
    %935 = vmatpush1.msra.mxu0 0.0
    %936 = vmatprep.subr.mxu0 0.0
    %937 = vmatpush1.msra.mxu0 0.0
    %938 = vmatprep.subr.mxu0 0.0
    %939 = vmatpush1.msra.mxu0 0.0
    %940 = vmatprep.subr.mxu0 0.0
    %941 = vmatpush1.msra.mxu0 0.0
    %942 = vmatprep.subr.mxu0 0.0
    %943 = vmatpush1.msra.mxu0 0.0
    %944 = vmatprep.subr.mxu0 0.0
    %945 = vmatpush1.msra.mxu0 0.0
    %946 = vmatprep.subr.mxu0 0.0
    %947 = vmatpush1.msra.mxu0 0.0
    %948 = vmatprep.subr.mxu0 0.0
    %949 = vmatpush1.msra.mxu0 0.0
    %950 = vmatprep.subr.mxu0 0.0
    %951 = vmatpush1.msra.mxu0 0.0
    %952 = vmatprep.subr.mxu0 0.0
    %953 = vmatpush1.msra.mxu0 0.0
    %954 = vmatprep.subr.mxu0 0.0
    %955 = vmatpush1.msra.mxu0 0.0
    %956 = vmatprep.subr.mxu0 0.0
    %957 = vmatpush1.msra.mxu0 0.0
    %958 = vmatprep.subr.mxu0 0.0
    %959 = vmatpush1.msra.mxu0 0.0
    %960 = vmatprep.subr.mxu0 0.0
    %961 = vmatpush1.msra.mxu0 0.0
    %962 = vmatprep.subr.mxu0 0.0
    %963 = vmatpush1.msra.mxu0 0.0
    %964 = vmatprep.subr.mxu0 0.0
    %965 = vmatpush1.msra.mxu0 0.0
    %966 = vmatprep.subr.mxu0 0.0
    %967 = vmatpush1.msra.mxu0 0.0
    %968 = vmatprep.subr.mxu0 0.0
    %969 = vmatpush1.msra.mxu0 0.0
    %970 = vmatprep.subr.mxu0 0.0
    %971 = vmatpush1.msra.mxu0 0.0
    %972 = vmatprep.subr.mxu0 0.0
    %973 = vmatpush1.msra.mxu0 0.0
    %974 = vmatprep.subr.mxu0 0.0
    %975 = vmatpush1.msra.mxu0 0.0
    %976 = vmatprep.subr.mxu0 0.0
    %977 = vmatpush1.msra.mxu0 0.0
    %978 = vmatprep.subr.mxu0 0.0
    %979 = vmatpush1.msra.mxu0 0.0
    %980 = vmatprep.subr.mxu0 0.0
    %981 = vmatpush1.msra.mxu0 0.0
    %982 = vmatprep.subr.mxu0 0.0
    %983 = vmatpush1.msra.mxu0 0.0
    %984 = vmatprep.subr.mxu0 0.0
    %985 = vmatpush1.msra.mxu0 0.0
    %986 = vmatprep.subr.mxu0 0.0
    %987 = vmatpush1.msra.mxu0 0.0
    %988 = vmatprep.mubr.f32.mxu0 0.0
    %v989 = vand.u32 %v63, 4294901760
    %990 = vmatmul.mubr.f32.gmra.mrb[0].mxu0 %v989
    %v991 = vpop.f32.mrb[0].mxu0
    %v992 = vadd.f32 %v848, %v991
    %v993 = vpop.f32.mrb[0].mxu0
    %994 = vmatprep.mubr.f32.mxu0 0.0
    %v995 = vand.u32 %v66, 4294901760
    %996 = vmatmul.mubr.f32.gmra.mrb[0].mxu0 %v995
    %v997 = vpop.f32.mrb[0].mxu0
    %v998 = vadd.f32 %v854, %v997
    %v999 = vpop.f32.mrb[0].mxu0
    %1000 = vmatprep.mubr.f32.mxu0 0.0
    %v1001 = vand.u32 %v69, 4294901760
    %1002 = vmatmul.mubr.f32.gmra.mrb[0].mxu0 %v1001
    %v1003 = vpop.f32.mrb[0].mxu0
    %v1004 = vadd.f32 %v860, %v1003
    %v1005 = vpop.f32.mrb[0].mxu0
    %1006 = vmatprep.mubr.f32.mxu0 0.0
    %v1007 = vand.u32 %v72, 4294901760
    %1008 = vmatmul.mubr.f32.gmra.mrb[0].mxu0 %v1007
    %v1009 = vpop.f32.mrb[0].mxu0
    %v1010 = vadd.f32 %v866, %v1009
    %v1011 = vpop.f32.mrb[0].mxu0
    %1012 = vmatprep.mubr.f32.mxu0 0.0
    %v1013 = vand.u32 %v75, 4294901760
    %1014 = vmatmul.mubr.f32.gmra.mrb[0].mxu0 %v1013
    %v1015 = vpop.f32.mrb[0].mxu0
    %v1016 = vadd.f32 %v872, %v1015
    %v1017 = vpop.f32.mrb[0].mxu0
    %1018 = vmatprep.mubr.f32.mxu0 0.0
    %v1019 = vand.u32 %v78, 4294901760
    %1020 = vmatmul.mubr.f32.gmra.mrb[0].mxu0 %v1019
    %v1021 = vpop.f32.mrb[0].mxu0
    %v1022 = vadd.f32 %v878, %v1021
    %v1023 = vpop.f32.mrb[0].mxu0
    %1024 = vmatprep.mubr.f32.mxu0 0.0
    %v1025 = vand.u32 %v81, 4294901760
    %1026 = vmatmul.mubr.f32.gmra.mrb[0].mxu0 %v1025
    %v1027 = vpop.f32.mrb[0].mxu0
    %v1028 = vadd.f32 %v884, %v1027
    %v1029 = vpop.f32.mrb[0].mxu0
    %1030 = vmatprep.mubr.f32.mxu0 0.0
    %v1031 = vand.u32 %v84, 4294901760
    %1032 = vmatmul.mubr.f32.gmra.mrb[0].mxu0 %v1031
    %v1033 = vpop.f32.mrb[0].mxu0
    %v1034 = vadd.f32 %v890, %v1033
    %v1035 = vpop.f32.mrb[0].mxu0
    %1036 = vmatprep.mubr.f32.mxu0 0.0
    %v1037 = vand.u32 %v87, 4294901760
    %1038 = vmatmul.mubr.f32.gmra.mrb[0].mxu0 %v1037
    %v1039 = vpop.f32.mrb[0].mxu0
    %v1040 = vadd.f32 %v896, %v1039
    %v1041 = vpop.f32.mrb[0].mxu0
    %1042 = vmatprep.mubr.f32.mxu0 0.0
    %v1043 = vand.u32 %v90, 4294901760
    %1044 = vmatmul.mubr.f32.gmra.mrb[0].mxu0 %v1043
    %v1045 = vpop.f32.mrb[0].mxu0
    %v1046 = vadd.f32 %v902, %v1045
    %v1047 = vpop.f32.mrb[0].mxu0
    %1048 = vmatprep.mubr.f32.mxu0 0.0
    %v1049 = vand.u32 %v93, 4294901760
    %1050 = vmatmul.mubr.f32.gmra.mrb[0].mxu0 %v1049
    %v1051 = vpop.f32.mrb[0].mxu0
    %v1052 = vadd.f32 %v908, %v1051
    %v1053 = vpop.f32.mrb[0].mxu0
    %1054 = vmatprep.mubr.f32.mxu0 0.0
    %v1055 = vand.u32 %v96, 4294901760
    %1056 = vmatmul.mubr.f32.gmra.mrb[0].mxu0 %v1055
    %v1057 = vpop.f32.mrb[0].mxu0
    %v1058 = vadd.f32 %v914, %v1057
    %v1059 = vpop.f32.mrb[0].mxu0
    %1060 = vmatprep.mubr.f32.mxu0 0.0
    %v1061 = vand.u32 %v99, 4294901760
    %1062 = vmatmul.mubr.f32.gmra.mrb[0].mxu0 %v1061
    %v1063 = vpop.f32.mrb[0].mxu0
    %v1064 = vadd.f32 %v920, %v1063
    %v1065 = vpop.f32.mrb[0].mxu0
    %1066 = vdwg.mxu0
    %v1067 = vmax.f32 %v992, 0.0
    %v1068 = vmax.f32 %v998, 0.0
    %v1069 = vmax.f32 %v1004, 0.0
    %v1070 = vmax.f32 %v1010, 0.0
    %v1071 = vmax.f32 %v1016, 0.0
    %v1072 = vmax.f32 %v1022, 0.0
    %v1073 = vmax.f32 %v1028, 0.0
    %v1074 = vmax.f32 %v1034, 0.0
    %v1075 = vmax.f32 %v1040, 0.0
    %v1076 = vmax.f32 %v1046, 0.0
    %v1077 = vmax.f32 %v1052, 0.0
    %v1078 = vmax.f32 %v1058, 0.0
    %v1079 = vmax.f32 %v1064, 0.0
    %v1080 = vlaneseq
    %v1081 = vshrl.u32 %v1080, 7
    %v1082 = vsub.s32 0, %v1081
    %v1083 = vrot.slane %v27, %v1082
    %1084 = vmatprep.subr.mxu0 0.0
    %v1085 = vand.u32 %v28, 4294901760
    %1086 = vmatpush1.msra.mxu0 %v1085
    %1087 = vmatprep.subr.mxu0 0.0
    %v1088 = vand.u32 %v29, 4294901760
    %1089 = vmatpush1.msra.mxu0 %v1088
    %1090 = vmatprep.subr.mxu0 0.0
    %v1091 = vand.u32 %v30, 4294901760
    %1092 = vmatpush1.msra.mxu0 %v1091
    %1093 = vmatprep.subr.mxu0 0.0
    %v1094 = vand.u32 %v31, 4294901760
    %1095 = vmatpush1.msra.mxu0 %v1094
    %1096 = vmatprep.subr.mxu0 0.0
    %v1097 = vand.u32 %v32, 4294901760
    %1098 = vmatpush1.msra.mxu0 %v1097
    %1099 = vmatprep.subr.mxu0 0.0
    %v1100 = vand.u32 %v33, 4294901760
    %1101 = vmatpush1.msra.mxu0 %v1100
    %1102 = vmatprep.subr.mxu0 0.0
    %v1103 = vand.u32 %v34, 4294901760
    %1104 = vmatpush1.msra.mxu0 %v1103
    %1105 = vmatprep.subr.mxu0 0.0
    %v1106 = vand.u32 %v35, 4294901760
    %1107 = vmatpush1.msra.mxu0 %v1106
    %1108 = vmatprep.subr.mxu0 0.0
    %v1109 = vand.u32 %v36, 4294901760
    %1110 = vmatpush1.msra.mxu0 %v1109
    %1111 = vmatprep.subr.mxu0 0.0
    %v1112 = vand.u32 %v37, 4294901760
    %1113 = vmatpush1.msra.mxu0 %v1112
    %1114 = vmatprep.subr.mxu0 0.0
    %v1115 = vand.u32 %v38, 4294901760
    %1116 = vmatpush1.msra.mxu0 %v1115
    %1117 = vmatprep.subr.mxu0 0.0
    %v1118 = vand.u32 %v39, 4294901760
    %1119 = vmatpush1.msra.mxu0 %v1118
    %1120 = vmatprep.subr.mxu0 0.0
    %v1121 = vand.u32 %v40, 4294901760
    %1122 = vmatpush1.msra.mxu0 %v1121
    %1123 = vmatprep.subr.mxu0 0.0
    %v1124 = vand.u32 %v41, 4294901760
    %1125 = vmatpush1.msra.mxu0 %v1124
    %1126 = vmatprep.subr.mxu0 0.0
    %v1127 = vand.u32 %v42, 4294901760
    %1128 = vmatpush1.msra.mxu0 %v1127
    %1129 = vmatprep.subr.mxu0 0.0
    %v1130 = vand.u32 %v43, 4294901760
    %1131 = vmatpush1.msra.mxu0 %v1130
    %1132 = vmatprep.subr.mxu0 0.0
    %1133 = vmatpush1.msra.mxu0 0.0
    %1134 = vmatprep.subr.mxu0 0.0
    %1135 = vmatpush1.msra.mxu0 0.0
    %1136 = vmatprep.subr.mxu0 0.0
    %1137 = vmatpush1.msra.mxu0 0.0
    %1138 = vmatprep.subr.mxu0 0.0
    %1139 = vmatpush1.msra.mxu0 0.0
    %1140 = vmatprep.subr.mxu0 0.0
    %1141 = vmatpush1.msra.mxu0 0.0
    %1142 = vmatprep.subr.mxu0 0.0
    %1143 = vmatpush1.msra.mxu0 0.0
    %1144 = vmatprep.subr.mxu0 0.0
    %1145 = vmatpush1.msra.mxu0 0.0
    %1146 = vmatprep.subr.mxu0 0.0
    %1147 = vmatpush1.msra.mxu0 0.0
    %1148 = vmatprep.subr.mxu0 0.0
    %1149 = vmatpush1.msra.mxu0 0.0
    %1150 = vmatprep.subr.mxu0 0.0
    %1151 = vmatpush1.msra.mxu0 0.0
    %1152 = vmatprep.subr.mxu0 0.0
    %1153 = vmatpush1.msra.mxu0 0.0
    %1154 = vmatprep.subr.mxu0 0.0
    %1155 = vmatpush1.msra.mxu0 0.0
    %1156 = vmatprep.subr.mxu0 0.0
    %1157 = vmatpush1.msra.mxu0 0.0
    %1158 = vmatprep.subr.mxu0 0.0
    %1159 = vmatpush1.msra.mxu0 0.0
    %1160 = vmatprep.subr.mxu0 0.0
    %1161 = vmatpush1.msra.mxu0 0.0
    %1162 = vmatprep.subr.mxu0 0.0
    %1163 = vmatpush1.msra.mxu0 0.0
    %1164 = vmatprep.mubr.f32.mxu0 0.0
    %v1165 = vand.u32 %v1067, 4294901760
    %v1166 = vsub.f32 %v1067, %v1165
    %v1167 = vand.u32 %v1166, 4294901760
    %v1168 = vsub.f32 %v1166, %v1167
    %v1169 = vand.u32 %v1168, 4294901760
    %1170 = vmatmul.mubr.f32.gmra.mrb[0].mxu0 %v1169
    %v1171 = vpop.f32.mrb[0].mxu0
    %v1172 = vadd.f32 %v1083, %v1171
    %v1173 = vpop.f32.mrb[0].mxu0
    %1174 = vmatprep.mubr.f32.mxu0 0.0
    %v1175 = vand.u32 %v1068, 4294901760
    %v1176 = vsub.f32 %v1068, %v1175
    %v1177 = vand.u32 %v1176, 4294901760
    %v1178 = vsub.f32 %v1176, %v1177
    %v1179 = vand.u32 %v1178, 4294901760
    %1180 = vmatmul.mubr.f32.gmra.mrb[0].mxu0 %v1179
    %v1181 = vpop.f32.mrb[0].mxu0
    %v1182 = vadd.f32 %v1083, %v1181
    %v1183 = vpop.f32.mrb[0].mxu0
    %1184 = vmatprep.mubr.f32.mxu0 0.0
    %v1185 = vand.u32 %v1069, 4294901760
    %v1186 = vsub.f32 %v1069, %v1185
    %v1187 = vand.u32 %v1186, 4294901760
    %v1188 = vsub.f32 %v1186, %v1187
    %v1189 = vand.u32 %v1188, 4294901760
    %1190 = vmatmul.mubr.f32.gmra.mrb[0].mxu0 %v1189
    %v1191 = vpop.f32.mrb[0].mxu0
    %v1192 = vadd.f32 %v1083, %v1191
    %v1193 = vpop.f32.mrb[0].mxu0
    %1194 = vmatprep.mubr.f32.mxu0 0.0
    %v1195 = vand.u32 %v1070, 4294901760
    %v1196 = vsub.f32 %v1070, %v1195
    %v1197 = vand.u32 %v1196, 4294901760
    %v1198 = vsub.f32 %v1196, %v1197
    %v1199 = vand.u32 %v1198, 4294901760
    %1200 = vmatmul.mubr.f32.gmra.mrb[0].mxu0 %v1199
    %v1201 = vpop.f32.mrb[0].mxu0
    %v1202 = vadd.f32 %v1083, %v1201
    %v1203 = vpop.f32.mrb[0].mxu0
    %1204 = vmatprep.mubr.f32.mxu0 0.0
    %v1205 = vand.u32 %v1071, 4294901760
    %v1206 = vsub.f32 %v1071, %v1205
    %v1207 = vand.u32 %v1206, 4294901760
    %v1208 = vsub.f32 %v1206, %v1207
    %v1209 = vand.u32 %v1208, 4294901760
    %1210 = vmatmul.mubr.f32.gmra.mrb[0].mxu0 %v1209
    %v1211 = vpop.f32.mrb[0].mxu0
    %v1212 = vadd.f32 %v1083, %v1211
    %v1213 = vpop.f32.mrb[0].mxu0
    %1214 = vmatprep.mubr.f32.mxu0 0.0
    %v1215 = vand.u32 %v1072, 4294901760
    %v1216 = vsub.f32 %v1072, %v1215
    %v1217 = vand.u32 %v1216, 4294901760
    %v1218 = vsub.f32 %v1216, %v1217
    %v1219 = vand.u32 %v1218, 4294901760
    %1220 = vmatmul.mubr.f32.gmra.mrb[0].mxu0 %v1219
    %v1221 = vpop.f32.mrb[0].mxu0
    %v1222 = vadd.f32 %v1083, %v1221
    %v1223 = vpop.f32.mrb[0].mxu0
    %1224 = vmatprep.mubr.f32.mxu0 0.0
    %v1225 = vand.u32 %v1073, 4294901760
    %v1226 = vsub.f32 %v1073, %v1225
    %v1227 = vand.u32 %v1226, 4294901760
    %v1228 = vsub.f32 %v1226, %v1227
    %v1229 = vand.u32 %v1228, 4294901760
    %1230 = vmatmul.mubr.f32.gmra.mrb[0].mxu0 %v1229
    %v1231 = vpop.f32.mrb[0].mxu0
    %v1232 = vadd.f32 %v1083, %v1231
    %v1233 = vpop.f32.mrb[0].mxu0
    %1234 = vmatprep.mubr.f32.mxu0 0.0
    %v1235 = vand.u32 %v1074, 4294901760
    %v1236 = vsub.f32 %v1074, %v1235
    %v1237 = vand.u32 %v1236, 4294901760
    %v1238 = vsub.f32 %v1236, %v1237
    %v1239 = vand.u32 %v1238, 4294901760
    %1240 = vmatmul.mubr.f32.gmra.mrb[0].mxu0 %v1239
    %v1241 = vpop.f32.mrb[0].mxu0
    %v1242 = vadd.f32 %v1083, %v1241
    %v1243 = vpop.f32.mrb[0].mxu0
    %1244 = vmatprep.mubr.f32.mxu0 0.0
    %v1245 = vand.u32 %v1075, 4294901760
    %v1246 = vsub.f32 %v1075, %v1245
    %v1247 = vand.u32 %v1246, 4294901760
    %v1248 = vsub.f32 %v1246, %v1247
    %v1249 = vand.u32 %v1248, 4294901760
    %1250 = vmatmul.mubr.f32.gmra.mrb[0].mxu0 %v1249
    %v1251 = vpop.f32.mrb[0].mxu0
    %v1252 = vadd.f32 %v1083, %v1251
    %v1253 = vpop.f32.mrb[0].mxu0
    %1254 = vmatprep.mubr.f32.mxu0 0.0
    %v1255 = vand.u32 %v1076, 4294901760
    %v1256 = vsub.f32 %v1076, %v1255
    %v1257 = vand.u32 %v1256, 4294901760
    %v1258 = vsub.f32 %v1256, %v1257
    %v1259 = vand.u32 %v1258, 4294901760
    %1260 = vmatmul.mubr.f32.gmra.mrb[0].mxu0 %v1259
    %v1261 = vpop.f32.mrb[0].mxu0
    %v1262 = vadd.f32 %v1083, %v1261
    %v1263 = vpop.f32.mrb[0].mxu0
    %1264 = vmatprep.mubr.f32.mxu0 0.0
    %v1265 = vand.u32 %v1077, 4294901760
    %v1266 = vsub.f32 %v1077, %v1265
    %v1267 = vand.u32 %v1266, 4294901760
    %v1268 = vsub.f32 %v1266, %v1267
    %v1269 = vand.u32 %v1268, 4294901760
    %1270 = vmatmul.mubr.f32.gmra.mrb[0].mxu0 %v1269
    %v1271 = vpop.f32.mrb[0].mxu0
    %v1272 = vadd.f32 %v1083, %v1271
    %v1273 = vpop.f32.mrb[0].mxu0
    %1274 = vmatprep.mubr.f32.mxu0 0.0
    %v1275 = vand.u32 %v1078, 4294901760
    %v1276 = vsub.f32 %v1078, %v1275
    %v1277 = vand.u32 %v1276, 4294901760
    %v1278 = vsub.f32 %v1276, %v1277
    %v1279 = vand.u32 %v1278, 4294901760
    %1280 = vmatmul.mubr.f32.gmra.mrb[0].mxu0 %v1279
    %v1281 = vpop.f32.mrb[0].mxu0
    %v1282 = vadd.f32 %v1083, %v1281
    %v1283 = vpop.f32.mrb[0].mxu0
    %1284 = vmatprep.mubr.f32.mxu0 0.0
    %v1285 = vand.u32 %v1079, 4294901760
    %v1286 = vsub.f32 %v1079, %v1285
    %v1287 = vand.u32 %v1286, 4294901760
    %v1288 = vsub.f32 %v1286, %v1287
    %v1289 = vand.u32 %v1288, 4294901760
    %1290 = vmatmul.mubr.f32.gmra.mrb[0].mxu0 %v1289
    %v1291 = vpop.f32.mrb[0].mxu0
    %v1292 = vadd.f32 %v1083, %v1291
    %v1293 = vpop.f32.mrb[0].mxu0
    %1294 = vdwg.mxu0
    %1295 = vmatprep.subr.mxu0 0.0
    %v1296 = vand.u32 %v28, 4294901760
    %v1297 = vsub.f32 %v28, %v1296
    %v1298 = vand.u32 %v1297, 4294901760
    %v1299 = vsub.f32 %v1297, %v1298
    %v1300 = vand.u32 %v1299, 4294901760
    %1301 = vmatpush1.msra.mxu0 %v1300
    %1302 = vmatprep.subr.mxu0 0.0
    %v1303 = vand.u32 %v29, 4294901760
    %v1304 = vsub.f32 %v29, %v1303
    %v1305 = vand.u32 %v1304, 4294901760
    %v1306 = vsub.f32 %v1304, %v1305
    %v1307 = vand.u32 %v1306, 4294901760
    %1308 = vmatpush1.msra.mxu0 %v1307
    %1309 = vmatprep.subr.mxu0 0.0
    %v1310 = vand.u32 %v30, 4294901760
    %v1311 = vsub.f32 %v30, %v1310
    %v1312 = vand.u32 %v1311, 4294901760
    %v1313 = vsub.f32 %v1311, %v1312
    %v1314 = vand.u32 %v1313, 4294901760
    %1315 = vmatpush1.msra.mxu0 %v1314
    %1316 = vmatprep.subr.mxu0 0.0
    %v1317 = vand.u32 %v31, 4294901760
    %v1318 = vsub.f32 %v31, %v1317
    %v1319 = vand.u32 %v1318, 4294901760
    %v1320 = vsub.f32 %v1318, %v1319
    %v1321 = vand.u32 %v1320, 4294901760
    %1322 = vmatpush1.msra.mxu0 %v1321
    %1323 = vmatprep.subr.mxu0 0.0
    %v1324 = vand.u32 %v32, 4294901760
    %v1325 = vsub.f32 %v32, %v1324
    %v1326 = vand.u32 %v1325, 4294901760
    %v1327 = vsub.f32 %v1325, %v1326
    %v1328 = vand.u32 %v1327, 4294901760
    %1329 = vmatpush1.msra.mxu0 %v1328
    %1330 = vmatprep.subr.mxu0 0.0
    %v1331 = vand.u32 %v33, 4294901760
    %v1332 = vsub.f32 %v33, %v1331
    %v1333 = vand.u32 %v1332, 4294901760
    %v1334 = vsub.f32 %v1332, %v1333
    %v1335 = vand.u32 %v1334, 4294901760
    %1336 = vmatpush1.msra.mxu0 %v1335
    %1337 = vmatprep.subr.mxu0 0.0
    %v1338 = vand.u32 %v34, 4294901760
    %v1339 = vsub.f32 %v34, %v1338
    %v1340 = vand.u32 %v1339, 4294901760
    %v1341 = vsub.f32 %v1339, %v1340
    %v1342 = vand.u32 %v1341, 4294901760
    %1343 = vmatpush1.msra.mxu0 %v1342
    %1344 = vmatprep.subr.mxu0 0.0
    %v1345 = vand.u32 %v35, 4294901760
    %v1346 = vsub.f32 %v35, %v1345
    %v1347 = vand.u32 %v1346, 4294901760
    %v1348 = vsub.f32 %v1346, %v1347
    %v1349 = vand.u32 %v1348, 4294901760
    %1350 = vmatpush1.msra.mxu0 %v1349
    %1351 = vmatprep.subr.mxu0 0.0
    %v1352 = vand.u32 %v36, 4294901760
    %v1353 = vsub.f32 %v36, %v1352
    %v1354 = vand.u32 %v1353, 4294901760
    %v1355 = vsub.f32 %v1353, %v1354
    %v1356 = vand.u32 %v1355, 4294901760
    %1357 = vmatpush1.msra.mxu0 %v1356
    %1358 = vmatprep.subr.mxu0 0.0
    %v1359 = vand.u32 %v37, 4294901760
    %v1360 = vsub.f32 %v37, %v1359
    %v1361 = vand.u32 %v1360, 4294901760
    %v1362 = vsub.f32 %v1360, %v1361
    %v1363 = vand.u32 %v1362, 4294901760
    %1364 = vmatpush1.msra.mxu0 %v1363
    %1365 = vmatprep.subr.mxu0 0.0
    %v1366 = vand.u32 %v38, 4294901760
    %v1367 = vsub.f32 %v38, %v1366
    %v1368 = vand.u32 %v1367, 4294901760
    %v1369 = vsub.f32 %v1367, %v1368
    %v1370 = vand.u32 %v1369, 4294901760
    %1371 = vmatpush1.msra.mxu0 %v1370
    %1372 = vmatprep.subr.mxu0 0.0
    %v1373 = vand.u32 %v39, 4294901760
    %v1374 = vsub.f32 %v39, %v1373
    %v1375 = vand.u32 %v1374, 4294901760
    %v1376 = vsub.f32 %v1374, %v1375
    %v1377 = vand.u32 %v1376, 4294901760
    %1378 = vmatpush1.msra.mxu0 %v1377
    %1379 = vmatprep.subr.mxu0 0.0
    %v1380 = vand.u32 %v40, 4294901760
    %v1381 = vsub.f32 %v40, %v1380
    %v1382 = vand.u32 %v1381, 4294901760
    %v1383 = vsub.f32 %v1381, %v1382
    %v1384 = vand.u32 %v1383, 4294901760
    %1385 = vmatpush1.msra.mxu0 %v1384
    %1386 = vmatprep.subr.mxu0 0.0
    %v1387 = vand.u32 %v41, 4294901760
    %v1388 = vsub.f32 %v41, %v1387
    %v1389 = vand.u32 %v1388, 4294901760
    %v1390 = vsub.f32 %v1388, %v1389
    %v1391 = vand.u32 %v1390, 4294901760
    %1392 = vmatpush1.msra.mxu0 %v1391
    %1393 = vmatprep.subr.mxu0 0.0
    %v1394 = vand.u32 %v42, 4294901760
    %v1395 = vsub.f32 %v42, %v1394
    %v1396 = vand.u32 %v1395, 4294901760
    %v1397 = vsub.f32 %v1395, %v1396
    %v1398 = vand.u32 %v1397, 4294901760
    %1399 = vmatpush1.msra.mxu0 %v1398
    %1400 = vmatprep.subr.mxu0 0.0
    %v1401 = vand.u32 %v43, 4294901760
    %v1402 = vsub.f32 %v43, %v1401
    %v1403 = vand.u32 %v1402, 4294901760
    %v1404 = vsub.f32 %v1402, %v1403
    %v1405 = vand.u32 %v1404, 4294901760
    %1406 = vmatpush1.msra.mxu0 %v1405
    %1407 = vmatprep.subr.mxu0 0.0
    %1408 = vmatpush1.msra.mxu0 0.0
    %1409 = vmatprep.subr.mxu0 0.0
    %1410 = vmatpush1.msra.mxu0 0.0
    %1411 = vmatprep.subr.mxu0 0.0
    %1412 = vmatpush1.msra.mxu0 0.0
    %1413 = vmatprep.subr.mxu0 0.0
    %1414 = vmatpush1.msra.mxu0 0.0
    %1415 = vmatprep.subr.mxu0 0.0
    %1416 = vmatpush1.msra.mxu0 0.0
    %1417 = vmatprep.subr.mxu0 0.0
    %1418 = vmatpush1.msra.mxu0 0.0
    %1419 = vmatprep.subr.mxu0 0.0
    %1420 = vmatpush1.msra.mxu0 0.0
    %1421 = vmatprep.subr.mxu0 0.0
    %1422 = vmatpush1.msra.mxu0 0.0
    %1423 = vmatprep.subr.mxu0 0.0
    %1424 = vmatpush1.msra.mxu0 0.0
    %1425 = vmatprep.subr.mxu0 0.0
    %1426 = vmatpush1.msra.mxu0 0.0
    %1427 = vmatprep.subr.mxu0 0.0
    %1428 = vmatpush1.msra.mxu0 0.0
    %1429 = vmatprep.subr.mxu0 0.0
    %1430 = vmatpush1.msra.mxu0 0.0
    %1431 = vmatprep.subr.mxu0 0.0
    %1432 = vmatpush1.msra.mxu0 0.0
    %1433 = vmatprep.subr.mxu0 0.0
    %1434 = vmatpush1.msra.mxu0 0.0
    %1435 = vmatprep.subr.mxu0 0.0
    %1436 = vmatpush1.msra.mxu0 0.0
    %1437 = vmatprep.subr.mxu0 0.0
    %1438 = vmatpush1.msra.mxu0 0.0
    %1439 = vmatprep.mubr.f32.mxu0 0.0
    %v1440 = vand.u32 %v1067, 4294901760
    %1441 = vmatmul.mubr.f32.gmra.mrb[0].mxu0 %v1440
    %v1442 = vpop.f32.mrb[0].mxu0
    %v1443 = vadd.f32 %v1172, %v1442
    %v1444 = vpop.f32.mrb[0].mxu0
    %1445 = vmatprep.mubr.f32.mxu0 0.0
    %v1446 = vand.u32 %v1068, 4294901760
    %1447 = vmatmul.mubr.f32.gmra.mrb[0].mxu0 %v1446
    %v1448 = vpop.f32.mrb[0].mxu0
    %v1449 = vadd.f32 %v1182, %v1448
    %v1450 = vpop.f32.mrb[0].mxu0
    %1451 = vmatprep.mubr.f32.mxu0 0.0
    %v1452 = vand.u32 %v1069, 4294901760
    %1453 = vmatmul.mubr.f32.gmra.mrb[0].mxu0 %v1452
    %v1454 = vpop.f32.mrb[0].mxu0
    %v1455 = vadd.f32 %v1192, %v1454
    %v1456 = vpop.f32.mrb[0].mxu0
    %1457 = vmatprep.mubr.f32.mxu0 0.0
    %v1458 = vand.u32 %v1070, 4294901760
    %1459 = vmatmul.mubr.f32.gmra.mrb[0].mxu0 %v1458
    %v1460 = vpop.f32.mrb[0].mxu0
    %v1461 = vadd.f32 %v1202, %v1460
    %v1462 = vpop.f32.mrb[0].mxu0
    %1463 = vmatprep.mubr.f32.mxu0 0.0
    %v1464 = vand.u32 %v1071, 4294901760
    %1465 = vmatmul.mubr.f32.gmra.mrb[0].mxu0 %v1464
    %v1466 = vpop.f32.mrb[0].mxu0
    %v1467 = vadd.f32 %v1212, %v1466
    %v1468 = vpop.f32.mrb[0].mxu0
    %1469 = vmatprep.mubr.f32.mxu0 0.0
    %v1470 = vand.u32 %v1072, 4294901760
    %1471 = vmatmul.mubr.f32.gmra.mrb[0].mxu0 %v1470
    %v1472 = vpop.f32.mrb[0].mxu0
    %v1473 = vadd.f32 %v1222, %v1472
    %v1474 = vpop.f32.mrb[0].mxu0
    %1475 = vmatprep.mubr.f32.mxu0 0.0
    %v1476 = vand.u32 %v1073, 4294901760
    %1477 = vmatmul.mubr.f32.gmra.mrb[0].mxu0 %v1476
    %v1478 = vpop.f32.mrb[0].mxu0
    %v1479 = vadd.f32 %v1232, %v1478
    %v1480 = vpop.f32.mrb[0].mxu0
    %1481 = vmatprep.mubr.f32.mxu0 0.0
    %v1482 = vand.u32 %v1074, 4294901760
    %1483 = vmatmul.mubr.f32.gmra.mrb[0].mxu0 %v1482
    %v1484 = vpop.f32.mrb[0].mxu0
    %v1485 = vadd.f32 %v1242, %v1484
    %v1486 = vpop.f32.mrb[0].mxu0
    %1487 = vmatprep.mubr.f32.mxu0 0.0
    %v1488 = vand.u32 %v1075, 4294901760
    %1489 = vmatmul.mubr.f32.gmra.mrb[0].mxu0 %v1488
    %v1490 = vpop.f32.mrb[0].mxu0
    %v1491 = vadd.f32 %v1252, %v1490
    %v1492 = vpop.f32.mrb[0].mxu0
    %1493 = vmatprep.mubr.f32.mxu0 0.0
    %v1494 = vand.u32 %v1076, 4294901760
    %1495 = vmatmul.mubr.f32.gmra.mrb[0].mxu0 %v1494
    %v1496 = vpop.f32.mrb[0].mxu0
    %v1497 = vadd.f32 %v1262, %v1496
    %v1498 = vpop.f32.mrb[0].mxu0
    %1499 = vmatprep.mubr.f32.mxu0 0.0
    %v1500 = vand.u32 %v1077, 4294901760
    %1501 = vmatmul.mubr.f32.gmra.mrb[0].mxu0 %v1500
    %v1502 = vpop.f32.mrb[0].mxu0
    %v1503 = vadd.f32 %v1272, %v1502
    %v1504 = vpop.f32.mrb[0].mxu0
    %1505 = vmatprep.mubr.f32.mxu0 0.0
    %v1506 = vand.u32 %v1078, 4294901760
    %1507 = vmatmul.mubr.f32.gmra.mrb[0].mxu0 %v1506
    %v1508 = vpop.f32.mrb[0].mxu0
    %v1509 = vadd.f32 %v1282, %v1508
    %v1510 = vpop.f32.mrb[0].mxu0
    %1511 = vmatprep.mubr.f32.mxu0 0.0
    %v1512 = vand.u32 %v1079, 4294901760
    %1513 = vmatmul.mubr.f32.gmra.mrb[0].mxu0 %v1512
    %v1514 = vpop.f32.mrb[0].mxu0
    %v1515 = vadd.f32 %v1292, %v1514
    %v1516 = vpop.f32.mrb[0].mxu0
    %1517 = vdwg.mxu0
    %1518 = vmatprep.subr.mxu0 0.0
    %v1519 = vand.u32 %v28, 4294901760
    %v1520 = vsub.f32 %v28, %v1519
    %1521 = vmatpush1.msra.mxu0 %v1520
    %1522 = vmatprep.subr.mxu0 0.0
    %v1523 = vand.u32 %v29, 4294901760
    %v1524 = vsub.f32 %v29, %v1523
    %1525 = vmatpush1.msra.mxu0 %v1524
    %1526 = vmatprep.subr.mxu0 0.0
    %v1527 = vand.u32 %v30, 4294901760
    %v1528 = vsub.f32 %v30, %v1527
    %1529 = vmatpush1.msra.mxu0 %v1528
    %1530 = vmatprep.subr.mxu0 0.0
    %v1531 = vand.u32 %v31, 4294901760
    %v1532 = vsub.f32 %v31, %v1531
    %1533 = vmatpush1.msra.mxu0 %v1532
    %1534 = vmatprep.subr.mxu0 0.0
    %v1535 = vand.u32 %v32, 4294901760
    %v1536 = vsub.f32 %v32, %v1535
    %1537 = vmatpush1.msra.mxu0 %v1536
    %1538 = vmatprep.subr.mxu0 0.0
    %v1539 = vand.u32 %v33, 4294901760
    %v1540 = vsub.f32 %v33, %v1539
    %1541 = vmatpush1.msra.mxu0 %v1540
    %1542 = vmatprep.subr.mxu0 0.0
    %v1543 = vand.u32 %v34, 4294901760
    %v1544 = vsub.f32 %v34, %v1543
    %1545 = vmatpush1.msra.mxu0 %v1544
    %1546 = vmatprep.subr.mxu0 0.0
    %v1547 = vand.u32 %v35, 4294901760
    %v1548 = vsub.f32 %v35, %v1547
    %1549 = vmatpush1.msra.mxu0 %v1548
    %1550 = vmatprep.subr.mxu0 0.0
    %v1551 = vand.u32 %v36, 4294901760
    %v1552 = vsub.f32 %v36, %v1551
    %1553 = vmatpush1.msra.mxu0 %v1552
    %1554 = vmatprep.subr.mxu0 0.0
    %v1555 = vand.u32 %v37, 4294901760
    %v1556 = vsub.f32 %v37, %v1555
    %1557 = vmatpush1.msra.mxu0 %v1556
    %1558 = vmatprep.subr.mxu0 0.0
    %v1559 = vand.u32 %v38, 4294901760
    %v1560 = vsub.f32 %v38, %v1559
    %1561 = vmatpush1.msra.mxu0 %v1560
    %1562 = vmatprep.subr.mxu0 0.0
    %v1563 = vand.u32 %v39, 4294901760
    %v1564 = vsub.f32 %v39, %v1563
    %1565 = vmatpush1.msra.mxu0 %v1564
    %1566 = vmatprep.subr.mxu0 0.0
    %v1567 = vand.u32 %v40, 4294901760
    %v1568 = vsub.f32 %v40, %v1567
    %1569 = vmatpush1.msra.mxu0 %v1568
    %1570 = vmatprep.subr.mxu0 0.0
    %v1571 = vand.u32 %v41, 4294901760
    %v1572 = vsub.f32 %v41, %v1571
    %1573 = vmatpush1.msra.mxu0 %v1572
    %1574 = vmatprep.subr.mxu0 0.0
    %v1575 = vand.u32 %v42, 4294901760
    %v1576 = vsub.f32 %v42, %v1575
    %1577 = vmatpush1.msra.mxu0 %v1576
    %1578 = vmatprep.subr.mxu0 0.0
    %v1579 = vand.u32 %v43, 4294901760
    %v1580 = vsub.f32 %v43, %v1579
    %1581 = vmatpush1.msra.mxu0 %v1580
    %1582 = vmatprep.subr.mxu0 0.0
    %1583 = vmatpush1.msra.mxu0 0.0
    %1584 = vmatprep.subr.mxu0 0.0
    %1585 = vmatpush1.msra.mxu0 0.0
    %1586 = vmatprep.subr.mxu0 0.0
    %1587 = vmatpush1.msra.mxu0 0.0
    %1588 = vmatprep.subr.mxu0 0.0
    %1589 = vmatpush1.msra.mxu0 0.0
    %1590 = vmatprep.subr.mxu0 0.0
    %1591 = vmatpush1.msra.mxu0 0.0
    %1592 = vmatprep.subr.mxu0 0.0
    %1593 = vmatpush1.msra.mxu0 0.0
    %1594 = vmatprep.subr.mxu0 0.0
    %1595 = vmatpush1.msra.mxu0 0.0
    %1596 = vmatprep.subr.mxu0 0.0
    %1597 = vmatpush1.msra.mxu0 0.0
    %1598 = vmatprep.subr.mxu0 0.0
    %1599 = vmatpush1.msra.mxu0 0.0
    %1600 = vmatprep.subr.mxu0 0.0
    %1601 = vmatpush1.msra.mxu0 0.0
    %1602 = vmatprep.subr.mxu0 0.0
    %1603 = vmatpush1.msra.mxu0 0.0
    %1604 = vmatprep.subr.mxu0 0.0
    %1605 = vmatpush1.msra.mxu0 0.0
    %1606 = vmatprep.subr.mxu0 0.0
    %1607 = vmatpush1.msra.mxu0 0.0
    %1608 = vmatprep.subr.mxu0 0.0
    %1609 = vmatpush1.msra.mxu0 0.0
    %1610 = vmatprep.subr.mxu0 0.0
    %1611 = vmatpush1.msra.mxu0 0.0
    %1612 = vmatprep.subr.mxu0 0.0
    %1613 = vmatpush1.msra.mxu0 0.0
    %1614 = vmatprep.mubr.f32.mxu0 0.0
    %v1615 = vand.u32 %v1067, 4294901760
    %v1616 = vsub.f32 %v1067, %v1615
    %1617 = vmatmul.mubr.f32.gmra.mrb[0].mxu0 %v1616
    %v1618 = vpop.f32.mrb[0].mxu0
    %v1619 = vadd.f32 %v1443, %v1618
    %v1620 = vpop.f32.mrb[0].mxu0
    %1621 = vmatprep.mubr.f32.mxu0 0.0
    %v1622 = vand.u32 %v1068, 4294901760
    %v1623 = vsub.f32 %v1068, %v1622
    %1624 = vmatmul.mubr.f32.gmra.mrb[0].mxu0 %v1623
    %v1625 = vpop.f32.mrb[0].mxu0
    %v1626 = vadd.f32 %v1449, %v1625
    %v1627 = vpop.f32.mrb[0].mxu0
    %1628 = vmatprep.mubr.f32.mxu0 0.0
    %v1629 = vand.u32 %v1069, 4294901760
    %v1630 = vsub.f32 %v1069, %v1629
    %1631 = vmatmul.mubr.f32.gmra.mrb[0].mxu0 %v1630
    %v1632 = vpop.f32.mrb[0].mxu0
    %v1633 = vadd.f32 %v1455, %v1632
    %v1634 = vpop.f32.mrb[0].mxu0
    %1635 = vmatprep.mubr.f32.mxu0 0.0
    %v1636 = vand.u32 %v1070, 4294901760
    %v1637 = vsub.f32 %v1070, %v1636
    %1638 = vmatmul.mubr.f32.gmra.mrb[0].mxu0 %v1637
    %v1639 = vpop.f32.mrb[0].mxu0
    %v1640 = vadd.f32 %v1461, %v1639
    %v1641 = vpop.f32.mrb[0].mxu0
    %1642 = vmatprep.mubr.f32.mxu0 0.0
    %v1643 = vand.u32 %v1071, 4294901760
    %v1644 = vsub.f32 %v1071, %v1643
    %1645 = vmatmul.mubr.f32.gmra.mrb[0].mxu0 %v1644
    %v1646 = vpop.f32.mrb[0].mxu0
    %v1647 = vadd.f32 %v1467, %v1646
    %v1648 = vpop.f32.mrb[0].mxu0
    %1649 = vmatprep.mubr.f32.mxu0 0.0
    %v1650 = vand.u32 %v1072, 4294901760
    %v1651 = vsub.f32 %v1072, %v1650
    %1652 = vmatmul.mubr.f32.gmra.mrb[0].mxu0 %v1651
    %v1653 = vpop.f32.mrb[0].mxu0
    %v1654 = vadd.f32 %v1473, %v1653
    %v1655 = vpop.f32.mrb[0].mxu0
    %1656 = vmatprep.mubr.f32.mxu0 0.0
    %v1657 = vand.u32 %v1073, 4294901760
    %v1658 = vsub.f32 %v1073, %v1657
    %1659 = vmatmul.mubr.f32.gmra.mrb[0].mxu0 %v1658
    %v1660 = vpop.f32.mrb[0].mxu0
    %v1661 = vadd.f32 %v1479, %v1660
    %v1662 = vpop.f32.mrb[0].mxu0
    %1663 = vmatprep.mubr.f32.mxu0 0.0
    %v1664 = vand.u32 %v1074, 4294901760
    %v1665 = vsub.f32 %v1074, %v1664
    %1666 = vmatmul.mubr.f32.gmra.mrb[0].mxu0 %v1665
    %v1667 = vpop.f32.mrb[0].mxu0
    %v1668 = vadd.f32 %v1485, %v1667
    %v1669 = vpop.f32.mrb[0].mxu0
    %1670 = vmatprep.mubr.f32.mxu0 0.0
    %v1671 = vand.u32 %v1075, 4294901760
    %v1672 = vsub.f32 %v1075, %v1671
    %1673 = vmatmul.mubr.f32.gmra.mrb[0].mxu0 %v1672
    %v1674 = vpop.f32.mrb[0].mxu0
    %v1675 = vadd.f32 %v1491, %v1674
    %v1676 = vpop.f32.mrb[0].mxu0
    %1677 = vmatprep.mubr.f32.mxu0 0.0
    %v1678 = vand.u32 %v1076, 4294901760
    %v1679 = vsub.f32 %v1076, %v1678
    %1680 = vmatmul.mubr.f32.gmra.mrb[0].mxu0 %v1679
    %v1681 = vpop.f32.mrb[0].mxu0
    %v1682 = vadd.f32 %v1497, %v1681
    %v1683 = vpop.f32.mrb[0].mxu0
    %1684 = vmatprep.mubr.f32.mxu0 0.0
    %v1685 = vand.u32 %v1077, 4294901760
    %v1686 = vsub.f32 %v1077, %v1685
    %1687 = vmatmul.mubr.f32.gmra.mrb[0].mxu0 %v1686
    %v1688 = vpop.f32.mrb[0].mxu0
    %v1689 = vadd.f32 %v1503, %v1688
    %v1690 = vpop.f32.mrb[0].mxu0
    %1691 = vmatprep.mubr.f32.mxu0 0.0
    %v1692 = vand.u32 %v1078, 4294901760
    %v1693 = vsub.f32 %v1078, %v1692
    %1694 = vmatmul.mubr.f32.gmra.mrb[0].mxu0 %v1693
    %v1695 = vpop.f32.mrb[0].mxu0
    %v1696 = vadd.f32 %v1509, %v1695
    %v1697 = vpop.f32.mrb[0].mxu0
    %1698 = vmatprep.mubr.f32.mxu0 0.0
    %v1699 = vand.u32 %v1079, 4294901760
    %v1700 = vsub.f32 %v1079, %v1699
    %1701 = vmatmul.mubr.f32.gmra.mrb[0].mxu0 %v1700
    %v1702 = vpop.f32.mrb[0].mxu0
    %v1703 = vadd.f32 %v1515, %v1702
    %v1704 = vpop.f32.mrb[0].mxu0
    %1705 = vdwg.mxu0
    %1706 = vmatprep.subr.mxu0 0.0
    %v1707 = vand.u32 %v28, 4294901760
    %1708 = vmatpush1.msra.mxu0 %v1707
    %1709 = vmatprep.subr.mxu0 0.0
    %v1710 = vand.u32 %v29, 4294901760
    %1711 = vmatpush1.msra.mxu0 %v1710
    %1712 = vmatprep.subr.mxu0 0.0
    %v1713 = vand.u32 %v30, 4294901760
    %1714 = vmatpush1.msra.mxu0 %v1713
    %1715 = vmatprep.subr.mxu0 0.0
    %v1716 = vand.u32 %v31, 4294901760
    %1717 = vmatpush1.msra.mxu0 %v1716
    %1718 = vmatprep.subr.mxu0 0.0
    %v1719 = vand.u32 %v32, 4294901760
    %1720 = vmatpush1.msra.mxu0 %v1719
    %1721 = vmatprep.subr.mxu0 0.0
    %v1722 = vand.u32 %v33, 4294901760
    %1723 = vmatpush1.msra.mxu0 %v1722
    %1724 = vmatprep.subr.mxu0 0.0
    %v1725 = vand.u32 %v34, 4294901760
    %1726 = vmatpush1.msra.mxu0 %v1725
    %1727 = vmatprep.subr.mxu0 0.0
    %v1728 = vand.u32 %v35, 4294901760
    %1729 = vmatpush1.msra.mxu0 %v1728
    %1730 = vmatprep.subr.mxu0 0.0
    %v1731 = vand.u32 %v36, 4294901760
    %1732 = vmatpush1.msra.mxu0 %v1731
    %1733 = vmatprep.subr.mxu0 0.0
    %v1734 = vand.u32 %v37, 4294901760
    %1735 = vmatpush1.msra.mxu0 %v1734
    %1736 = vmatprep.subr.mxu0 0.0
    %v1737 = vand.u32 %v38, 4294901760
    %1738 = vmatpush1.msra.mxu0 %v1737
    %1739 = vmatprep.subr.mxu0 0.0
    %v1740 = vand.u32 %v39, 4294901760
    %1741 = vmatpush1.msra.mxu0 %v1740
    %1742 = vmatprep.subr.mxu0 0.0
    %v1743 = vand.u32 %v40, 4294901760
    %1744 = vmatpush1.msra.mxu0 %v1743
    %1745 = vmatprep.subr.mxu0 0.0
    %v1746 = vand.u32 %v41, 4294901760
    %1747 = vmatpush1.msra.mxu0 %v1746
    %1748 = vmatprep.subr.mxu0 0.0
    %v1749 = vand.u32 %v42, 4294901760
    %1750 = vmatpush1.msra.mxu0 %v1749
    %1751 = vmatprep.subr.mxu0 0.0
    %v1752 = vand.u32 %v43, 4294901760
    %1753 = vmatpush1.msra.mxu0 %v1752
    %1754 = vmatprep.subr.mxu0 0.0
    %1755 = vmatpush1.msra.mxu0 0.0
    %1756 = vmatprep.subr.mxu0 0.0
    %1757 = vmatpush1.msra.mxu0 0.0
    %1758 = vmatprep.subr.mxu0 0.0
    %1759 = vmatpush1.msra.mxu0 0.0
    %1760 = vmatprep.subr.mxu0 0.0
    %1761 = vmatpush1.msra.mxu0 0.0
    %1762 = vmatprep.subr.mxu0 0.0
    %1763 = vmatpush1.msra.mxu0 0.0
    %1764 = vmatprep.subr.mxu0 0.0
    %1765 = vmatpush1.msra.mxu0 0.0
    %1766 = vmatprep.subr.mxu0 0.0
    %1767 = vmatpush1.msra.mxu0 0.0
    %1768 = vmatprep.subr.mxu0 0.0
    %1769 = vmatpush1.msra.mxu0 0.0
    %1770 = vmatprep.subr.mxu0 0.0
    %1771 = vmatpush1.msra.mxu0 0.0
    %1772 = vmatprep.subr.mxu0 0.0
    %1773 = vmatpush1.msra.mxu0 0.0
    %1774 = vmatprep.subr.mxu0 0.0
    %1775 = vmatpush1.msra.mxu0 0.0
    %1776 = vmatprep.subr.mxu0 0.0
    %1777 = vmatpush1.msra.mxu0 0.0
    %1778 = vmatprep.subr.mxu0 0.0
    %1779 = vmatpush1.msra.mxu0 0.0
    %1780 = vmatprep.subr.mxu0 0.0
    %1781 = vmatpush1.msra.mxu0 0.0
    %1782 = vmatprep.subr.mxu0 0.0
    %1783 = vmatpush1.msra.mxu0 0.0
    %1784 = vmatprep.subr.mxu0 0.0
    %1785 = vmatpush1.msra.mxu0 0.0
    %1786 = vmatprep.mubr.f32.mxu0 0.0
    %v1787 = vand.u32 %v1067, 4294901760
    %v1788 = vsub.f32 %v1067, %v1787
    %v1789 = vand.u32 %v1788, 4294901760
    %1790 = vmatmul.mubr.f32.gmra.mrb[0].mxu0 %v1789
    %v1791 = vpop.f32.mrb[0].mxu0
    %v1792 = vadd.f32 %v1619, %v1791
    %v1793 = vpop.f32.mrb[0].mxu0
    %1794 = vmatprep.mubr.f32.mxu0 0.0
    %v1795 = vand.u32 %v1068, 4294901760
    %v1796 = vsub.f32 %v1068, %v1795
    %v1797 = vand.u32 %v1796, 4294901760
    %1798 = vmatmul.mubr.f32.gmra.mrb[0].mxu0 %v1797
    %v1799 = vpop.f32.mrb[0].mxu0
    %v1800 = vadd.f32 %v1626, %v1799
    %v1801 = vpop.f32.mrb[0].mxu0
    %1802 = vmatprep.mubr.f32.mxu0 0.0
    %v1803 = vand.u32 %v1069, 4294901760
    %v1804 = vsub.f32 %v1069, %v1803
    %v1805 = vand.u32 %v1804, 4294901760
    %1806 = vmatmul.mubr.f32.gmra.mrb[0].mxu0 %v1805
    %v1807 = vpop.f32.mrb[0].mxu0
    %v1808 = vadd.f32 %v1633, %v1807
    %v1809 = vpop.f32.mrb[0].mxu0
    %1810 = vmatprep.mubr.f32.mxu0 0.0
    %v1811 = vand.u32 %v1070, 4294901760
    %v1812 = vsub.f32 %v1070, %v1811
    %v1813 = vand.u32 %v1812, 4294901760
    %1814 = vmatmul.mubr.f32.gmra.mrb[0].mxu0 %v1813
    %v1815 = vpop.f32.mrb[0].mxu0
    %v1816 = vadd.f32 %v1640, %v1815
    %v1817 = vpop.f32.mrb[0].mxu0
    %1818 = vmatprep.mubr.f32.mxu0 0.0
    %v1819 = vand.u32 %v1071, 4294901760
    %v1820 = vsub.f32 %v1071, %v1819
    %v1821 = vand.u32 %v1820, 4294901760
    %1822 = vmatmul.mubr.f32.gmra.mrb[0].mxu0 %v1821
    %v1823 = vpop.f32.mrb[0].mxu0
    %v1824 = vadd.f32 %v1647, %v1823
    %v1825 = vpop.f32.mrb[0].mxu0
    %1826 = vmatprep.mubr.f32.mxu0 0.0
    %v1827 = vand.u32 %v1072, 4294901760
    %v1828 = vsub.f32 %v1072, %v1827
    %v1829 = vand.u32 %v1828, 4294901760
    %1830 = vmatmul.mubr.f32.gmra.mrb[0].mxu0 %v1829
    %v1831 = vpop.f32.mrb[0].mxu0
    %v1832 = vadd.f32 %v1654, %v1831
    %v1833 = vpop.f32.mrb[0].mxu0
    %1834 = vmatprep.mubr.f32.mxu0 0.0
    %v1835 = vand.u32 %v1073, 4294901760
    %v1836 = vsub.f32 %v1073, %v1835
    %v1837 = vand.u32 %v1836, 4294901760
    %1838 = vmatmul.mubr.f32.gmra.mrb[0].mxu0 %v1837
    %v1839 = vpop.f32.mrb[0].mxu0
    %v1840 = vadd.f32 %v1661, %v1839
    %v1841 = vpop.f32.mrb[0].mxu0
    %1842 = vmatprep.mubr.f32.mxu0 0.0
    %v1843 = vand.u32 %v1074, 4294901760
    %v1844 = vsub.f32 %v1074, %v1843
    %v1845 = vand.u32 %v1844, 4294901760
    %1846 = vmatmul.mubr.f32.gmra.mrb[0].mxu0 %v1845
    %v1847 = vpop.f32.mrb[0].mxu0
    %v1848 = vadd.f32 %v1668, %v1847
    %v1849 = vpop.f32.mrb[0].mxu0
    %1850 = vmatprep.mubr.f32.mxu0 0.0
    %v1851 = vand.u32 %v1075, 4294901760
    %v1852 = vsub.f32 %v1075, %v1851
    %v1853 = vand.u32 %v1852, 4294901760
    %1854 = vmatmul.mubr.f32.gmra.mrb[0].mxu0 %v1853
    %v1855 = vpop.f32.mrb[0].mxu0
    %v1856 = vadd.f32 %v1675, %v1855
    %v1857 = vpop.f32.mrb[0].mxu0
    %1858 = vmatprep.mubr.f32.mxu0 0.0
    %v1859 = vand.u32 %v1076, 4294901760
    %v1860 = vsub.f32 %v1076, %v1859
    %v1861 = vand.u32 %v1860, 4294901760
    %1862 = vmatmul.mubr.f32.gmra.mrb[0].mxu0 %v1861
    %v1863 = vpop.f32.mrb[0].mxu0
    %v1864 = vadd.f32 %v1682, %v1863
    %v1865 = vpop.f32.mrb[0].mxu0
    %1866 = vmatprep.mubr.f32.mxu0 0.0
    %v1867 = vand.u32 %v1077, 4294901760
    %v1868 = vsub.f32 %v1077, %v1867
    %v1869 = vand.u32 %v1868, 4294901760
    %1870 = vmatmul.mubr.f32.gmra.mrb[0].mxu0 %v1869
    %v1871 = vpop.f32.mrb[0].mxu0
    %v1872 = vadd.f32 %v1689, %v1871
    %v1873 = vpop.f32.mrb[0].mxu0
    %1874 = vmatprep.mubr.f32.mxu0 0.0
    %v1875 = vand.u32 %v1078, 4294901760
    %v1876 = vsub.f32 %v1078, %v1875
    %v1877 = vand.u32 %v1876, 4294901760
    %1878 = vmatmul.mubr.f32.gmra.mrb[0].mxu0 %v1877
    %v1879 = vpop.f32.mrb[0].mxu0
    %v1880 = vadd.f32 %v1696, %v1879
    %v1881 = vpop.f32.mrb[0].mxu0
    %1882 = vmatprep.mubr.f32.mxu0 0.0
    %v1883 = vand.u32 %v1079, 4294901760
    %v1884 = vsub.f32 %v1079, %v1883
    %v1885 = vand.u32 %v1884, 4294901760
    %1886 = vmatmul.mubr.f32.gmra.mrb[0].mxu0 %v1885
    %v1887 = vpop.f32.mrb[0].mxu0
    %v1888 = vadd.f32 %v1703, %v1887
    %v1889 = vpop.f32.mrb[0].mxu0
    %1890 = vdwg.mxu0
    %1891 = vmatprep.subr.mxu0 0.0
    %v1892 = vand.u32 %v28, 4294901760
    %v1893 = vsub.f32 %v28, %v1892
    %v1894 = vand.u32 %v1893, 4294901760
    %1895 = vmatpush1.msra.mxu0 %v1894
    %1896 = vmatprep.subr.mxu0 0.0
    %v1897 = vand.u32 %v29, 4294901760
    %v1898 = vsub.f32 %v29, %v1897
    %v1899 = vand.u32 %v1898, 4294901760
    %1900 = vmatpush1.msra.mxu0 %v1899
    %1901 = vmatprep.subr.mxu0 0.0
    %v1902 = vand.u32 %v30, 4294901760
    %v1903 = vsub.f32 %v30, %v1902
    %v1904 = vand.u32 %v1903, 4294901760
    %1905 = vmatpush1.msra.mxu0 %v1904
    %1906 = vmatprep.subr.mxu0 0.0
    %v1907 = vand.u32 %v31, 4294901760
    %v1908 = vsub.f32 %v31, %v1907
    %v1909 = vand.u32 %v1908, 4294901760
    %1910 = vmatpush1.msra.mxu0 %v1909
    %1911 = vmatprep.subr.mxu0 0.0
    %v1912 = vand.u32 %v32, 4294901760
    %v1913 = vsub.f32 %v32, %v1912
    %v1914 = vand.u32 %v1913, 4294901760
    %1915 = vmatpush1.msra.mxu0 %v1914
    %1916 = vmatprep.subr.mxu0 0.0
    %v1917 = vand.u32 %v33, 4294901760
    %v1918 = vsub.f32 %v33, %v1917
    %v1919 = vand.u32 %v1918, 4294901760
    %1920 = vmatpush1.msra.mxu0 %v1919
    %1921 = vmatprep.subr.mxu0 0.0
    %v1922 = vand.u32 %v34, 4294901760
    %v1923 = vsub.f32 %v34, %v1922
    %v1924 = vand.u32 %v1923, 4294901760
    %1925 = vmatpush1.msra.mxu0 %v1924
    %1926 = vmatprep.subr.mxu0 0.0
    %v1927 = vand.u32 %v35, 4294901760
    %v1928 = vsub.f32 %v35, %v1927
    %v1929 = vand.u32 %v1928, 4294901760
    %1930 = vmatpush1.msra.mxu0 %v1929
    %1931 = vmatprep.subr.mxu0 0.0
    %v1932 = vand.u32 %v36, 4294901760
    %v1933 = vsub.f32 %v36, %v1932
    %v1934 = vand.u32 %v1933, 4294901760
    %1935 = vmatpush1.msra.mxu0 %v1934
    %1936 = vmatprep.subr.mxu0 0.0
    %v1937 = vand.u32 %v37, 4294901760
    %v1938 = vsub.f32 %v37, %v1937
    %v1939 = vand.u32 %v1938, 4294901760
    %1940 = vmatpush1.msra.mxu0 %v1939
    %1941 = vmatprep.subr.mxu0 0.0
    %v1942 = vand.u32 %v38, 4294901760
    %v1943 = vsub.f32 %v38, %v1942
    %v1944 = vand.u32 %v1943, 4294901760
    %1945 = vmatpush1.msra.mxu0 %v1944
    %1946 = vmatprep.subr.mxu0 0.0
    %v1947 = vand.u32 %v39, 4294901760
    %v1948 = vsub.f32 %v39, %v1947
    %v1949 = vand.u32 %v1948, 4294901760
    %1950 = vmatpush1.msra.mxu0 %v1949
    %1951 = vmatprep.subr.mxu0 0.0
    %v1952 = vand.u32 %v40, 4294901760
    %v1953 = vsub.f32 %v40, %v1952
    %v1954 = vand.u32 %v1953, 4294901760
    %1955 = vmatpush1.msra.mxu0 %v1954
    %1956 = vmatprep.subr.mxu0 0.0
    %v1957 = vand.u32 %v41, 4294901760
    %v1958 = vsub.f32 %v41, %v1957
    %v1959 = vand.u32 %v1958, 4294901760
    %1960 = vmatpush1.msra.mxu0 %v1959
    %1961 = vmatprep.subr.mxu0 0.0
    %v1962 = vand.u32 %v42, 4294901760
    %v1963 = vsub.f32 %v42, %v1962
    %v1964 = vand.u32 %v1963, 4294901760
    %1965 = vmatpush1.msra.mxu0 %v1964
    %1966 = vmatprep.subr.mxu0 0.0
    %v1967 = vand.u32 %v43, 4294901760
    %v1968 = vsub.f32 %v43, %v1967
    %v1969 = vand.u32 %v1968, 4294901760
    %1970 = vmatpush1.msra.mxu0 %v1969
    %1971 = vmatprep.subr.mxu0 0.0
    %1972 = vmatpush1.msra.mxu0 0.0
    %1973 = vmatprep.subr.mxu0 0.0
    %1974 = vmatpush1.msra.mxu0 0.0
    %1975 = vmatprep.subr.mxu0 0.0
    %1976 = vmatpush1.msra.mxu0 0.0
    %1977 = vmatprep.subr.mxu0 0.0
    %1978 = vmatpush1.msra.mxu0 0.0
    %1979 = vmatprep.subr.mxu0 0.0
    %1980 = vmatpush1.msra.mxu0 0.0
    %1981 = vmatprep.subr.mxu0 0.0
    %1982 = vmatpush1.msra.mxu0 0.0
    %1983 = vmatprep.subr.mxu0 0.0
    %1984 = vmatpush1.msra.mxu0 0.0
    %1985 = vmatprep.subr.mxu0 0.0
    %1986 = vmatpush1.msra.mxu0 0.0
    %1987 = vmatprep.subr.mxu0 0.0
    %1988 = vmatpush1.msra.mxu0 0.0
    %1989 = vmatprep.subr.mxu0 0.0
    %1990 = vmatpush1.msra.mxu0 0.0
    %1991 = vmatprep.subr.mxu0 0.0
    %1992 = vmatpush1.msra.mxu0 0.0
    %1993 = vmatprep.subr.mxu0 0.0
    %1994 = vmatpush1.msra.mxu0 0.0
    %1995 = vmatprep.subr.mxu0 0.0
    %1996 = vmatpush1.msra.mxu0 0.0
    %1997 = vmatprep.subr.mxu0 0.0
    %1998 = vmatpush1.msra.mxu0 0.0
    %1999 = vmatprep.subr.mxu0 0.0
    %2000 = vmatpush1.msra.mxu0 0.0
    %2001 = vmatprep.subr.mxu0 0.0
    %2002 = vmatpush1.msra.mxu0 0.0
    %2003 = vmatprep.mubr.f32.mxu0 0.0
    %v2004 = vand.u32 %v1067, 4294901760
    %2005 = vmatmul.mubr.f32.gmra.mrb[0].mxu0 %v2004
    %v2006 = vpop.f32.mrb[0].mxu0
    %v2007 = vadd.f32 %v1792, %v2006
    %v2008 = vpop.f32.mrb[0].mxu0
    %2009 = vmatprep.mubr.f32.mxu0 0.0
    %v2010 = vand.u32 %v1068, 4294901760
    %2011 = vmatmul.mubr.f32.gmra.mrb[0].mxu0 %v2010
    %v2012 = vpop.f32.mrb[0].mxu0
    %v2013 = vadd.f32 %v1800, %v2012
    %v2014 = vpop.f32.mrb[0].mxu0
    %2015 = vmatprep.mubr.f32.mxu0 0.0
    %v2016 = vand.u32 %v1069, 4294901760
    %2017 = vmatmul.mubr.f32.gmra.mrb[0].mxu0 %v2016
    %v2018 = vpop.f32.mrb[0].mxu0
    %v2019 = vadd.f32 %v1808, %v2018
    %v2020 = vpop.f32.mrb[0].mxu0
    %2021 = vmatprep.mubr.f32.mxu0 0.0
    %v2022 = vand.u32 %v1070, 4294901760
    %2023 = vmatmul.mubr.f32.gmra.mrb[0].mxu0 %v2022
    %v2024 = vpop.f32.mrb[0].mxu0
    %v2025 = vadd.f32 %v1816, %v2024
    %v2026 = vpop.f32.mrb[0].mxu0
    %2027 = vmatprep.mubr.f32.mxu0 0.0
    %v2028 = vand.u32 %v1071, 4294901760
    %2029 = vmatmul.mubr.f32.gmra.mrb[0].mxu0 %v2028
    %v2030 = vpop.f32.mrb[0].mxu0
    %v2031 = vadd.f32 %v1824, %v2030
    %v2032 = vpop.f32.mrb[0].mxu0
    %2033 = vmatprep.mubr.f32.mxu0 0.0
    %v2034 = vand.u32 %v1072, 4294901760
    %2035 = vmatmul.mubr.f32.gmra.mrb[0].mxu0 %v2034
    %v2036 = vpop.f32.mrb[0].mxu0
    %v2037 = vadd.f32 %v1832, %v2036
    %v2038 = vpop.f32.mrb[0].mxu0
    %2039 = vmatprep.mubr.f32.mxu0 0.0
    %v2040 = vand.u32 %v1073, 4294901760
    %2041 = vmatmul.mubr.f32.gmra.mrb[0].mxu0 %v2040
    %v2042 = vpop.f32.mrb[0].mxu0
    %v2043 = vadd.f32 %v1840, %v2042
    %v2044 = vpop.f32.mrb[0].mxu0
    %2045 = vmatprep.mubr.f32.mxu0 0.0
    %v2046 = vand.u32 %v1074, 4294901760
    %2047 = vmatmul.mubr.f32.gmra.mrb[0].mxu0 %v2046
    %v2048 = vpop.f32.mrb[0].mxu0
    %v2049 = vadd.f32 %v1848, %v2048
    %v2050 = vpop.f32.mrb[0].mxu0
    %2051 = vmatprep.mubr.f32.mxu0 0.0
    %v2052 = vand.u32 %v1075, 4294901760
    %2053 = vmatmul.mubr.f32.gmra.mrb[0].mxu0 %v2052
    %v2054 = vpop.f32.mrb[0].mxu0
    %v2055 = vadd.f32 %v1856, %v2054
    %v2056 = vpop.f32.mrb[0].mxu0
    %2057 = vmatprep.mubr.f32.mxu0 0.0
    %v2058 = vand.u32 %v1076, 4294901760
    %2059 = vmatmul.mubr.f32.gmra.mrb[0].mxu0 %v2058
    %v2060 = vpop.f32.mrb[0].mxu0
    %v2061 = vadd.f32 %v1864, %v2060
    %v2062 = vpop.f32.mrb[0].mxu0
    %2063 = vmatprep.mubr.f32.mxu0 0.0
    %v2064 = vand.u32 %v1077, 4294901760
    %2065 = vmatmul.mubr.f32.gmra.mrb[0].mxu0 %v2064
    %v2066 = vpop.f32.mrb[0].mxu0
    %v2067 = vadd.f32 %v1872, %v2066
    %v2068 = vpop.f32.mrb[0].mxu0
    %2069 = vmatprep.mubr.f32.mxu0 0.0
    %v2070 = vand.u32 %v1078, 4294901760
    %2071 = vmatmul.mubr.f32.gmra.mrb[0].mxu0 %v2070
    %v2072 = vpop.f32.mrb[0].mxu0
    %v2073 = vadd.f32 %v1880, %v2072
    %v2074 = vpop.f32.mrb[0].mxu0
    %2075 = vmatprep.mubr.f32.mxu0 0.0
    %v2076 = vand.u32 %v1079, 4294901760
    %2077 = vmatmul.mubr.f32.gmra.mrb[0].mxu0 %v2076
    %v2078 = vpop.f32.mrb[0].mxu0
    %v2079 = vadd.f32 %v1888, %v2078
    %v2080 = vpop.f32.mrb[0].mxu0
    %2081 = vdwg.mxu0
    %2082 = vmatprep.subr.mxu0 0.0
    %v2083 = vand.u32 %v28, 4294901760
    %2084 = vmatpush1.msra.mxu0 %v2083
    %2085 = vmatprep.subr.mxu0 0.0
    %v2086 = vand.u32 %v29, 4294901760
    %2087 = vmatpush1.msra.mxu0 %v2086
    %2088 = vmatprep.subr.mxu0 0.0
    %v2089 = vand.u32 %v30, 4294901760
    %2090 = vmatpush1.msra.mxu0 %v2089
    %2091 = vmatprep.subr.mxu0 0.0
    %v2092 = vand.u32 %v31, 4294901760
    %2093 = vmatpush1.msra.mxu0 %v2092
    %2094 = vmatprep.subr.mxu0 0.0
    %v2095 = vand.u32 %v32, 4294901760
    %2096 = vmatpush1.msra.mxu0 %v2095
    %2097 = vmatprep.subr.mxu0 0.0
    %v2098 = vand.u32 %v33, 4294901760
    %2099 = vmatpush1.msra.mxu0 %v2098
    %2100 = vmatprep.subr.mxu0 0.0
    %v2101 = vand.u32 %v34, 4294901760
    %2102 = vmatpush1.msra.mxu0 %v2101
    %2103 = vmatprep.subr.mxu0 0.0
    %v2104 = vand.u32 %v35, 4294901760
    %2105 = vmatpush1.msra.mxu0 %v2104
    %2106 = vmatprep.subr.mxu0 0.0
    %v2107 = vand.u32 %v36, 4294901760
    %2108 = vmatpush1.msra.mxu0 %v2107
    %2109 = vmatprep.subr.mxu0 0.0
    %v2110 = vand.u32 %v37, 4294901760
    %2111 = vmatpush1.msra.mxu0 %v2110
    %2112 = vmatprep.subr.mxu0 0.0
    %v2113 = vand.u32 %v38, 4294901760
    %2114 = vmatpush1.msra.mxu0 %v2113
    %2115 = vmatprep.subr.mxu0 0.0
    %v2116 = vand.u32 %v39, 4294901760
    %2117 = vmatpush1.msra.mxu0 %v2116
    %2118 = vmatprep.subr.mxu0 0.0
    %v2119 = vand.u32 %v40, 4294901760
    %2120 = vmatpush1.msra.mxu0 %v2119
    %2121 = vmatprep.subr.mxu0 0.0
    %v2122 = vand.u32 %v41, 4294901760
    %2123 = vmatpush1.msra.mxu0 %v2122
    %2124 = vmatprep.subr.mxu0 0.0
    %v2125 = vand.u32 %v42, 4294901760
    %2126 = vmatpush1.msra.mxu0 %v2125
    %2127 = vmatprep.subr.mxu0 0.0
    %v2128 = vand.u32 %v43, 4294901760
    %2129 = vmatpush1.msra.mxu0 %v2128
    %2130 = vmatprep.subr.mxu0 0.0
    %2131 = vmatpush1.msra.mxu0 0.0
    %2132 = vmatprep.subr.mxu0 0.0
    %2133 = vmatpush1.msra.mxu0 0.0
    %2134 = vmatprep.subr.mxu0 0.0
    %2135 = vmatpush1.msra.mxu0 0.0
    %2136 = vmatprep.subr.mxu0 0.0
    %2137 = vmatpush1.msra.mxu0 0.0
    %2138 = vmatprep.subr.mxu0 0.0
    %2139 = vmatpush1.msra.mxu0 0.0
    %2140 = vmatprep.subr.mxu0 0.0
    %2141 = vmatpush1.msra.mxu0 0.0
    %2142 = vmatprep.subr.mxu0 0.0
    %2143 = vmatpush1.msra.mxu0 0.0
    %2144 = vmatprep.subr.mxu0 0.0
    %2145 = vmatpush1.msra.mxu0 0.0
    %2146 = vmatprep.subr.mxu0 0.0
    %2147 = vmatpush1.msra.mxu0 0.0
    %2148 = vmatprep.subr.mxu0 0.0
    %2149 = vmatpush1.msra.mxu0 0.0
    %2150 = vmatprep.subr.mxu0 0.0
    %2151 = vmatpush1.msra.mxu0 0.0
    %2152 = vmatprep.subr.mxu0 0.0
    %2153 = vmatpush1.msra.mxu0 0.0
    %2154 = vmatprep.subr.mxu0 0.0
    %2155 = vmatpush1.msra.mxu0 0.0
    %2156 = vmatprep.subr.mxu0 0.0
    %2157 = vmatpush1.msra.mxu0 0.0
    %2158 = vmatprep.subr.mxu0 0.0
    %2159 = vmatpush1.msra.mxu0 0.0
    %2160 = vmatprep.subr.mxu0 0.0
    %2161 = vmatpush1.msra.mxu0 0.0
    %2162 = vmatprep.mubr.f32.mxu0 0.0
    %v2163 = vand.u32 %v1067, 4294901760
    %2164 = vmatmul.mubr.f32.gmra.mrb[0].mxu0 %v2163
    %v2165 = vpop.f32.mrb[0].mxu0
    %v2166 = vadd.f32 %v2007, %v2165
    %v2167 = vpop.f32.mrb[0].mxu0
    %2168 = vmatprep.mubr.f32.mxu0 0.0
    %v2169 = vand.u32 %v1068, 4294901760
    %2170 = vmatmul.mubr.f32.gmra.mrb[0].mxu0 %v2169
    %v2171 = vpop.f32.mrb[0].mxu0
    %v2172 = vadd.f32 %v2013, %v2171
    %v2173 = vpop.f32.mrb[0].mxu0
    %2174 = vmatprep.mubr.f32.mxu0 0.0
    %v2175 = vand.u32 %v1069, 4294901760
    %2176 = vmatmul.mubr.f32.gmra.mrb[0].mxu0 %v2175
    %v2177 = vpop.f32.mrb[0].mxu0
    %v2178 = vadd.f32 %v2019, %v2177
    %v2179 = vpop.f32.mrb[0].mxu0
    %2180 = vmatprep.mubr.f32.mxu0 0.0
    %v2181 = vand.u32 %v1070, 4294901760
    %2182 = vmatmul.mubr.f32.gmra.mrb[0].mxu0 %v2181
    %v2183 = vpop.f32.mrb[0].mxu0
    %v2184 = vadd.f32 %v2025, %v2183
    %v2185 = vpop.f32.mrb[0].mxu0
    %2186 = vmatprep.mubr.f32.mxu0 0.0
    %v2187 = vand.u32 %v1071, 4294901760
    %2188 = vmatmul.mubr.f32.gmra.mrb[0].mxu0 %v2187
    %v2189 = vpop.f32.mrb[0].mxu0
    %v2190 = vadd.f32 %v2031, %v2189
    %v2191 = vpop.f32.mrb[0].mxu0
    %2192 = vmatprep.mubr.f32.mxu0 0.0
    %v2193 = vand.u32 %v1072, 4294901760
    %2194 = vmatmul.mubr.f32.gmra.mrb[0].mxu0 %v2193
    %v2195 = vpop.f32.mrb[0].mxu0
    %v2196 = vadd.f32 %v2037, %v2195
    %v2197 = vpop.f32.mrb[0].mxu0
    %2198 = vmatprep.mubr.f32.mxu0 0.0
    %v2199 = vand.u32 %v1073, 4294901760
    %2200 = vmatmul.mubr.f32.gmra.mrb[0].mxu0 %v2199
    %v2201 = vpop.f32.mrb[0].mxu0
    %v2202 = vadd.f32 %v2043, %v2201
    %v2203 = vpop.f32.mrb[0].mxu0
    %2204 = vmatprep.mubr.f32.mxu0 0.0
    %v2205 = vand.u32 %v1074, 4294901760
    %2206 = vmatmul.mubr.f32.gmra.mrb[0].mxu0 %v2205
    %v2207 = vpop.f32.mrb[0].mxu0
    %v2208 = vadd.f32 %v2049, %v2207
    %v2209 = vpop.f32.mrb[0].mxu0
    %2210 = vmatprep.mubr.f32.mxu0 0.0
    %v2211 = vand.u32 %v1075, 4294901760
    %2212 = vmatmul.mubr.f32.gmra.mrb[0].mxu0 %v2211
    %v2213 = vpop.f32.mrb[0].mxu0
    %v2214 = vadd.f32 %v2055, %v2213
    %v2215 = vpop.f32.mrb[0].mxu0
    %2216 = vmatprep.mubr.f32.mxu0 0.0
    %v2217 = vand.u32 %v1076, 4294901760
    %2218 = vmatmul.mubr.f32.gmra.mrb[0].mxu0 %v2217
    %v2219 = vpop.f32.mrb[0].mxu0
    %v2220 = vadd.f32 %v2061, %v2219
    %v2221 = vpop.f32.mrb[0].mxu0
    %2222 = vmatprep.mubr.f32.mxu0 0.0
    %v2223 = vand.u32 %v1077, 4294901760
    %2224 = vmatmul.mubr.f32.gmra.mrb[0].mxu0 %v2223
    %v2225 = vpop.f32.mrb[0].mxu0
    %v2226 = vadd.f32 %v2067, %v2225
    %v2227 = vpop.f32.mrb[0].mxu0
    %2228 = vmatprep.mubr.f32.mxu0 0.0
    %v2229 = vand.u32 %v1078, 4294901760
    %2230 = vmatmul.mubr.f32.gmra.mrb[0].mxu0 %v2229
    %v2231 = vpop.f32.mrb[0].mxu0
    %v2232 = vadd.f32 %v2073, %v2231
    %v2233 = vpop.f32.mrb[0].mxu0
    %2234 = vmatprep.mubr.f32.mxu0 0.0
    %v2235 = vand.u32 %v1079, 4294901760
    %2236 = vmatmul.mubr.f32.gmra.mrb[0].mxu0 %v2235
    %v2237 = vpop.f32.mrb[0].mxu0
    %v2238 = vadd.f32 %v2079, %v2237
    %v2239 = vpop.f32.mrb[0].mxu0
    %2240 = vdwg.mxu0
    %v2241 = vmax.f32 %v2166, 0.0
    %v2242 = vmax.f32 %v2172, 0.0
    %v2243 = vmax.f32 %v2178, 0.0
    %v2244 = vmax.f32 %v2184, 0.0
    %v2245 = vmax.f32 %v2190, 0.0
    %v2246 = vmax.f32 %v2196, 0.0
    %v2247 = vmax.f32 %v2202, 0.0
    %v2248 = vmax.f32 %v2208, 0.0
    %v2249 = vmax.f32 %v2214, 0.0
    %v2250 = vmax.f32 %v2220, 0.0
    %v2251 = vmax.f32 %v2226, 0.0
    %v2252 = vmax.f32 %v2232, 0.0
    %v2253 = vmax.f32 %v2238, 0.0
    %2254 = vst.msk [vmem:[%s2] sm:$0xff] %vm61, %v2241
    %2255 = vst.msk [vmem:[%s2 + $0x8] sm:$0xff] %vm61, %v2242
    %2256 = vst.msk [vmem:[%s2 + $0x10] sm:$0xff] %vm61, %v2243
    %2257 = vst.msk [vmem:[%s2 + $0x18] sm:$0xff] %vm61, %v2244
    %2258 = vst.msk [vmem:[%s2 + $0x20] sm:$0xff] %vm61, %v2245
    %2259 = vst.msk [vmem:[%s2 + $0x28] sm:$0xff] %vm61, %v2246
    %2260 = vst.msk [vmem:[%s2 + $0x30] sm:$0xff] %vm61, %v2247
    %2261 = vst.msk [vmem:[%s2 + $0x38] sm:$0xff] %vm61, %v2248
    %2262 = vst.msk [vmem:[%s2 + $0x40] sm:$0xff] %vm61, %v2249
    %2263 = vst.msk [vmem:[%s2 + $0x48] sm:$0xff] %vm61, %v2250
    %2264 = vst.msk [vmem:[%s2 + $0x50] sm:$0xff] %vm61, %v2251
    %2265 = vst.msk [vmem:[%s2 + $0x58] sm:$0xff] %vm61, %v2252
    %vm2266 = vcmask 27648
    %2267 = vst.msk [vmem:[%s2 + $0x60] sm:$0xf] %vm2266, %v2253
    // Predicated region
    $region14: #{ffnn_forward.1} parent=1 // pred_check
      _
    $region15: #{ffnn_forward.1} parent=1 // pred_check_branch
      %2269 = sbr.rel (0) target = $region17
    $region16: #{ffnn_forward.1} parent=1 // pred_region
      _
    $region17: #{ffnn_forward.1} parent=1 // pred_fallthru
      _
    // Predicated region
    $region18: #{ffnn_forward.1} parent=1 // pred_check
      _
    $region19: #{ffnn_forward.1} parent=1 // pred_check_branch
      %2271 = sbr.rel (0) target = $region21
    $region20: #{ffnn_forward.1} parent=1 // pred_region
      _
    $region21: #{ffnn_forward.1} parent=1 // pred_fallthru
      _
    %2272 = vsyncpa [#allocation3], 1

</llo_original>
